<compile_context>
chip_gen: v5e
topology: v5e:2x2
jax: 0.10.0
libtpu: 0.0.40
codegen_flags: <defaults>
</compile_context>

<pallas_src>
import functools
import math

import jax
import jax.numpy as jnp
from jax.experimental import pallas as pl
from jax.experimental.pallas import tpu as pltpu


# ----------------------------- small helpers -----------------------------

def _vmem_limit_bytes():
    """Generation-aware scoped-VMEM cap (v7x only has 64 MiB physical per TensorCore)."""
    try:
        cap = int(pltpu.get_tpu_info().vmem_capacity_bytes)
    except Exception:
        return 64 * 1024 * 1024                      # safe on every generation
    return min((cap * 3) // 4, 100 * 1024 * 1024)    # ~48 MiB on v7x, ~96 MiB on v5e/v6e


def _pick_tb(bt, lp, *, max_rows=1024):
    """Largest divisor of BT keeping >=2 grid row-blocks (megacore) and tb*Lp <= max_rows."""
    best = 1
    for t in range(1, bt + 1):
        if bt % t:
            continue
        if bt > 1 and bt // t < 2:
            continue
        if t > 1 and t * lp > max_rows:
            continue
        best = t
    return best


def _pick_mlp_chunk(hidden, max_chunk=512):
    """Largest divisor of the MLP hidden dim <= max_chunk, preferring lane (128) multiples."""
    if hidden <= max_chunk:
        return hidden
    for c in range(max_chunk, 0, -1):
        if hidden % c == 0 and c % 128 == 0:
            return c
    for c in range(max_chunk, 0, -1):
        if hidden % c == 0:
            return c
    return hidden


def _ln(x, g, b, eps=1e-5):
    """LayerNorm over the feature axis, f32 statistics (matches the fp32 LayerNorm subclass)."""
    mu = jnp.mean(x, axis=-1, keepdims=True)
    var = jnp.mean(jnp.square(x - mu), axis=-1, keepdims=True)
    return (x - mu) * jax.lax.rsqrt(var + eps) * g + b


# ----------------------------- fused transformer kernel -----------------------------

def fused_transformer_kernel(
        x_ref, pre_g, pre_b,
        ln1g, ln1b, wqkv, bqkv, wo, bo, ln2g, ln2b, wfct, bfcc, wpr, bpr,
        post_g, post_b, proj_w,
        x11_ref, x12_ref, xproj_ref,
        carry, qkv_s, attn_s,
        *, n_heads, tb, lp, lv):
    l = pl.program_id(1)
    n_layers = pl.num_programs(1)
    M, D = carry.shape
    hd = D // n_heads
    n_chunks, mlp_chunk = bfcc.shape

    # layer 0 of this row-block: seed the VMEM-resident residual stream with ln_pre(x).
    @pl.when(l == 0)
    def _():
        carry[...] = _ln(x_ref[...].astype(jnp.float32), pre_g[...], pre_b[...])

    x = carry[...]

    # ---------------- x1 = x + W_o . attention(ln_1(x)) ----------------
    xn = _ln(x, ln1g[...], ln1b[...])
    # single fused QKV matmul; 1/sqrt(hd) is pre-folded into the Q columns of wqkv/bqkv.
    qkv_s[...] = (jnp.dot(xn.astype(jnp.bfloat16), wqkv[...],
                          preferred_element_type=jnp.float32) + bqkv[...]).astype(qkv_s.dtype)

    kmask = None
    if lv < lp:  # padded token columns must not receive attention weight
        kmask = jax.lax.broadcasted_iota(jnp.int32, (lp, lp), 1) < lv

    # static loop over heads (lane offsets stay static) + fori_loop over the tb batch
    # elements (the large factor) to bound live ranges / code size.
    for h in range(n_heads):
        cq, ck, cv = h * hd, D + h * hd, 2 * D + h * hd

        def head_body(b, c, cq=cq, ck=ck, cv=cv):
            r0 = b * lp
            if not isinstance(b, int):
                r0 = pl.multiple_of(r0, lp)
            qh = qkv_s[pl.ds(r0, lp), cq:cq + hd]
            kh = qkv_s[pl.ds(r0, lp), ck:ck + hd]
            vh = qkv_s[pl.ds(r0, lp), cv:cv + hd]
            s = jax.lax.dot_general(qh, kh, (((1,), (1,)), ((), ())),
                                    preferred_element_type=jnp.float32)
            if kmask is not None:
                s = jnp.where(kmask, s, jnp.float32(-1e30))
            s = s - jnp.max(s, axis=-1, keepdims=True)
            p = jnp.exp(s)
            p = p * pl.reciprocal(jnp.sum(p, axis=-1, keepdims=True), approx=True)
            pv = jnp.dot(p.astype(jnp.bfloat16), vh, preferred_element_type=jnp.float32)
            attn_s[pl.ds(r0, lp), cq:cq + hd] = pv.astype(attn_s.dtype)
            return c

        if tb == 1:
            head_body(0, 0)
        else:
            jax.lax.fori_loop(0, tb, head_body, 0)

    # one full-K (M, D) x (D, D) output projection over the assembled head outputs.
    attn = jnp.dot(attn_s[...], wo[...], preferred_element_type=jnp.float32) + bo[...]
    x1 = x + attn

    # ---------------- x2 = x1 + MLP(ln_2(x1)), hidden dim tiled ----------------
    xn2 = _ln(x1, ln2g[...], ln2b[...]).astype(jnp.bfloat16)

    def mlp_body(k, acc):
        rs = k * mlp_chunk
        if not isinstance(k, int):
            rs = pl.multiple_of(rs, mlp_chunk)
        wfc_k = wfct[pl.ds(rs, mlp_chunk), :]                        # (chunk, D) bf16 row-slice
        h1 = jax.lax.dot_general(xn2, wfc_k, (((1,), (1,)), ((), ())),
                                 preferred_element_type=jnp.float32)  # (M, chunk)
        h1 = h1 + bfcc[pl.ds(k, 1), :]
        h1 = h1 * jax.nn.sigmoid(1.702 * h1)                        # QuickGELU, f32
        return acc + jnp.dot(h1.astype(jnp.bfloat16), wpr[pl.ds(rs, mlp_chunk), :],
                             preferred_element_type=jnp.float32)

    acc0 = jnp.zeros((M, D), jnp.float32)
    if n_chunks == 1:
        m = mlp_body(0, acc0)
    else:
        m = jax.lax.fori_loop(0, n_chunks, mlp_body, acc0)
    x2 = x1 + m + bpr[...]
    carry[...] = x2

    # ---------------- epilogue ----------------
    @pl.when(l == n_layers - 2)      # output of resblocks[:11]
    def _():
        x11_ref[...] = x2.astype(x11_ref.dtype)

    @pl.when(l == n_layers - 1)      # ln_post + proj fused behind the last block
    def _():
        x12 = _ln(x2, post_g[...], post_b[...])
        x12_ref[...] = x12.astype(x12_ref.dtype)
        xproj_ref[...] = jnp.dot(x12.astype(jnp.bfloat16), proj_w[...],
                                 preferred_element_type=jnp.float32).astype(xproj_ref.dtype)


def run_transformer(x2d, stacked, consts, *, heads, tb, lp, lv, out_dim):
    """All 12 residual blocks + ln_pre + ln_post + proj in one pallas_call."""
    M, D = x2d.shape
    rows = tb * lp
    n_row_blocks = M // rows
    n_layers = stacked['w_qkv'].shape[0]
    assert n_layers >= 2

    layer_keys = ('ln1_g', 'ln1_b', 'w_qkv', 'b_qkv', 'w_o', 'b_o',
                  'ln2_g', 'ln2_b', 'w_fc_t', 'b_fc_c', 'w_pr', 'b_pr')
    layer_args = [stacked[k] for k in layer_keys]
    pre_g, pre_b, post_g, post_b, proj_w = consts

    act_spec = pl.BlockSpec((rows, D), lambda i, l: (i, 0))
    const_spec = lambda a: pl.BlockSpec(a.shape, lambda i, l: (0,) * a.ndim)
    # per-layer weights: leading (squeezed) layer dim indexed by the "arbitrary" grid axis, so
    # layer l+1's weight DMA overlaps layer l's compute (double-buffered by default).
    layer_spec = lambda a: pl.BlockSpec((None,) + a.shape[1:],
                                        lambda i, l: (l,) + (0,) * (a.ndim - 1))

    kern = functools.partial(fused_transformer_kernel, n_heads=heads, tb=tb, lp=lp, lv=lv)

    out_shape = (jax.ShapeDtypeStruct((M, D), jnp.float32),
                 jax.ShapeDtypeStruct((M, D), jnp.float32),
                 jax.ShapeDtypeStruct((M, out_dim), jnp.float32))
    out_specs = (pl.BlockSpec((rows, D), lambda i, l: (i, 0)),
                 pl.BlockSpec((rows, D), lambda i, l: (i, 0)),
                 pl.BlockSpec((rows, out_dim), lambda i, l: (i, 0)))

    return pl.pallas_call(
        kern,
        out_shape=out_shape,
        grid=(n_row_blocks, n_layers),
        in_specs=([act_spec, const_spec(pre_g), const_spec(pre_b)]
                  + [layer_spec(a) for a in layer_args]
                  + [const_spec(post_g), const_spec(post_b), const_spec(proj_w)]),
        out_specs=out_specs,
        scratch_shapes=[pltpu.VMEM((rows, D), jnp.float32),        # resident residual stream
                        pltpu.VMEM((rows, 3 * D), jnp.bfloat16),   # fused QKV (bf16 scratch)
                        pltpu.VMEM((rows, D), jnp.bfloat16)],      # assembled head outputs
        compiler_params=pltpu.CompilerParams(
            dimension_semantics=("parallel", "arbitrary"),
            vmem_limit_bytes=_vmem_limit_bytes()),
    )(x2d, pre_g, pre_b, *layer_args, post_g, post_b, proj_w)


# ----------------------------- patch embedding -----------------------------

def matmul_bias_kernel(x_ref, w_ref, b_ref, o_ref):
    o_ref[...] = (jnp.dot(x_ref[...], w_ref[...], preferred_element_type=jnp.float32)
                  + b_ref[...]).astype(o_ref.dtype)


def pallas_linear(x2d, w, b, *, row_tile=1024):
    """Row-tiled linear (n,k)@(k,dout)+b, bf16 MXU operands, f32 output (HBM-bound)."""
    n, k = x2d.shape
    dout = w.shape[1]
    rt = min(row_tile, n)
    n_pad = pl.cdiv(n, rt) * rt
    xp = jnp.pad(x2d, ((0, n_pad - n), (0, 0))) if n_pad != n else x2d
    out = pl.pallas_call(
        matmul_bias_kernel,
        out_shape=jax.ShapeDtypeStruct((n_pad, dout), jnp.float32),
        grid=(n_pad // rt,),
        in_specs=[pl.BlockSpec((rt, k), lambda i: (i, 0)),
                  pl.BlockSpec(w.shape, lambda i: (0, 0)),
                  pl.BlockSpec(b.shape, lambda i: (0, 0))],
        out_specs=pl.BlockSpec((rt, dout), lambda i: (i, 0)),
        compiler_params=pltpu.CompilerParams(
            dimension_semantics=("parallel",), vmem_limit_bytes=_vmem_limit_bytes()),
    )(xp, w, b)
    return out[:n] if n_pad != n else out


def extract_patches(x, patch, stride):
    """x: (N, C, H, W) -> (N, num_patches, C*patch*patch) in conv-weight flatten order."""
    N, C, H, W = x.shape
    if patch == stride and H % patch == 0 and W % patch == 0:
        hr, wr = H // patch, W // patch
        p = x.reshape(N, C, hr, patch, wr, patch)
        p = jnp.transpose(p, (0, 2, 4, 1, 3, 5))
        return p.reshape(N, hr * wr, C * patch * patch)
    hr = (H - patch) // stride + 1
    wr = (W - patch) // stride + 1
    idx_h = (jnp.arange(hr) * stride)[:, None] + jnp.arange(patch)[None, :]
    idx_w = (jnp.arange(wr) * stride)[:, None] + jnp.arange(patch)[None, :]
    p = x[:, :, idx_h]
    p = p[:, :, :, :, idx_w]
    p = jnp.transpose(p, (0, 2, 4, 1, 3, 5))
    return p.reshape(N, hr * wr, C * patch * patch)


# ----------------------------- full forward -----------------------------

def vit_dat_forward(x, params, *, patch, stride, heads, tb=None):
    """x: (B, 3, H, W) f32 -> (x11, x12, xproj), each (B, L, .) — default forward path."""
    B = x.shape[0]
    patches = extract_patches(x, patch, stride)
    _, Np, K = patches.shape
    width = params['conv_w'].shape[1]

    emb = pallas_linear(patches.reshape(B * Np, K).astype(jnp.bfloat16),
                        params['conv_w'], params['conv_b']).reshape(B, Np, width)

    cls = jnp.broadcast_to(params['cls'][None, None, :], (B, 1, width))
    xs = jnp.concatenate([cls, emb], axis=1) + params['pos'][None]
    L = xs.shape[1]
    # pad tokens to a multiple of 16 so bf16-packed scratch row-slices stay tile-aligned;
    # padded tokens are masked as keys and sliced off at the end.
    Lp = ((L + 15) // 16) * 16
    if Lp != L:
        xs = jnp.pad(xs, ((0, 0), (0, Lp - L), (0, 0)))
    x2d = xs.reshape(B * Lp, width)

    if tb is None:
        tb = _pick_tb(B, Lp)

    consts = (params['ln_pre_g'], params['ln_pre_b'],
              params['ln_post_g'], params['ln_post_b'], params['proj'])
    out_dim = params['proj'].shape[1]

    x11_2d, x12_2d, xproj_2d = run_transformer(
        x2d, params['stacked'], consts, heads=heads, tb=tb, lp=Lp, lv=L, out_dim=out_dim)

    x11 = x11_2d.reshape(B, Lp, width)[:, :L]
    x12 = x12_2d.reshape(B, Lp, width)[:, :L]
    xproj = xproj_2d.reshape(B, Lp, out_dim)[:, :L]
    return x11, x12, xproj


# ----------------------------- parameter init / packing -----------------------------

def _stack_blocks(blocks, heads, mlp_chunk):
    """Stack per-layer params on a leading layer axis; fold 1/sqrt(hd) into the Q columns of
    w_qkv/b_qkv; store w_fc transposed (hidden on the sublane axis) and b_fc chunked; cast
    all MXU weights to bf16."""
    width = blocks[0]['w_qkv'].shape[0]
    hidden = blocks[0]['w_fc'].shape[1]
    n_layers = len(blocks)
    n_chunks = hidden // mlp_chunk
    hd = width // heads
    scale = 1.0 / math.sqrt(hd)
    st = lambda k: jnp.stack([b[k] for b in blocks], axis=0)
    qs = jnp.concatenate([jnp.full((width,), scale, jnp.float32),
                          jnp.ones((2 * width,), jnp.float32)])[None, None, :]
    return {
        'ln1_g': st('ln1_g'), 'ln1_b': st('ln1_b'),
        'w_qkv': (st('w_qkv') * qs).astype(jnp.bfloat16),            # (L, D, 3D)
        'b_qkv': st('b_qkv') * qs,                                   # (L, 1, 3D)
        'w_o': st('w_o').astype(jnp.bfloat16), 'b_o': st('b_o'),
        'ln2_g': st('ln2_g'), 'ln2_b': st('ln2_b'),
        'w_fc_t': jnp.transpose(st('w_fc'), (0, 2, 1)).astype(jnp.bfloat16),   # (L, 4D, D)
        'b_fc_c': st('b_fc').reshape(n_layers, n_chunks, mlp_chunk),           # (L, nC, chunk)
        'w_pr': st('w_pr').astype(jnp.bfloat16),                               # (L, 4D, D)
        'b_pr': st('b_pr'),
    }


def init_params(key, *, width, layers, heads, output_dim, patch, in_ch, n_tokens):
    assert width % heads == 0 and layers >= 2
    keys = jax.random.split(key, 8 + layers)
    sc = width ** -0.5
    f32, bf16 = jnp.float32, jnp.bfloat16
    p = {
        'conv_w': (0.02 * jax.random.normal(keys[0], (in_ch * patch * patch, width), f32)).astype(bf16),
        'conv_b': jnp.zeros((1, width), f32),             # conv1 has bias=False (zeros harmless)
        'cls': sc * jax.random.normal(keys[1], (width,), f32),
        'pos': sc * jax.random.normal(keys[2], (n_tokens, width), f32),
        'proj': (sc * jax.random.normal(keys[3], (width, output_dim), f32)).astype(bf16),
        'ln_pre_g': jnp.ones((1, width), f32), 'ln_pre_b': jnp.zeros((1, width), f32),
        'ln_post_g': jnp.ones((1, width), f32), 'ln_post_b': jnp.zeros((1, width), f32),
    }
    blocks = []
    for i in range(layers):
        bk = jax.random.split(keys[8 + i], 4)
        blocks.append(dict(
            ln1_g=jnp.ones((1, width), f32), ln1_b=jnp.zeros((1, width), f32),
            w_qkv=0.02 * jax.random.normal(bk[0], (width, 3 * width), f32),
            b_qkv=jnp.zeros((1, 3 * width), f32),
            w_o=0.02 * jax.random.normal(bk[1], (width, width), f32),
            b_o=jnp.zeros((1, width), f32),
            ln2_g=jnp.ones((1, width), f32), ln2_b=jnp.zeros((1, width), f32),
            w_fc=0.02 * jax.random.normal(bk[2], (width, 4 * width), f32),
            b_fc=jnp.zeros((1, 4 * width), f32),
            w_pr=0.02 * jax.random.normal(bk[3], (4 * width, width), f32),
            b_pr=jnp.zeros((1, width), f32),
        ))
    p['stacked'] = _stack_blocks(blocks, heads, _pick_mlp_chunk(4 * width))
    return p


# ----------------------------- main -----------------------------

if __name__ == "__main__":
    # small config consistent with the module (layers must be 12: forward indexes resblocks[11])
    B, C, H, W = 2, 3, 16, 16
    patch, stride = 8, 8
    width, layers, heads, output_dim = 32, 12, 4, 16
    h_res = (H - patch) // stride + 1
    w_res = (W - patch) // stride + 1
    n_tokens = h_res * w_res + 1

    key = jax.random.PRNGKey(0)
    pkey, xkey = jax.random.split(key)
    params = init_params(pkey, width=width, layers=layers, heads=heads,
                         output_dim=output_dim, patch=patch, in_ch=C, n_tokens=n_tokens)
    x = jax.random.normal(xkey, (B, C, H, W), jnp.float32)

    fwd = jax.jit(functools.partial(vit_dat_forward, patch=patch, stride=stride, heads=heads))
    x11, x12, xproj = fwd(x, params)
    jax.block_until_ready((x11, x12, xproj))

    assert x11.shape == (B, n_tokens, width)
    assert x12.shape == (B, n_tokens, width)
    assert xproj.shape == (B, n_tokens, output_dim)
    assert bool(jnp.isfinite(x11).all())
    assert bool(jnp.isfinite(x12).all())
    assert bool(jnp.isfinite(xproj).all())
    print("KERNEL_OK")
</pallas_src>

<mosaic_0001>
module attributes {stable_mosaic.version = 11 : i64} {
  func.func @matmul_bias_kernel(%arg0: i32, %arg1: memref<8x192xbf16, #tpu.memory_space<vmem>>, %arg2: memref<192x32xbf16, #tpu.memory_space<vmem>>, %arg3: memref<1x32xf32, #tpu.memory_space<vmem>>, %arg4: memref<8x32xf32, #tpu.memory_space<vmem>>) attributes {dimension_semantics = [#tpu.dimension_semantics<parallel>], iteration_bounds = array<i64: 1>, scalar_prefetch = 0 : i64, scratch_operands = 0 : i64, tpu.core_type = #tpu.core_type<tc>, window_params = [{transform_indices = @transform_0, window_bounds = array<i64: 8, 192>}, {pipeline_mode = #tpu.pipeline_mode<synchronous>, transform_indices = @transform_1, window_bounds = array<i64: 192, 32>}, {pipeline_mode = #tpu.pipeline_mode<synchronous>, transform_indices = @transform_2, window_bounds = array<i64: 1, 32>}, {transform_indices = @transform_3, window_bounds = array<i64: 8, 32>}]} {
    %c0 = arith.constant 0 : index
    %c0_0 = arith.constant 0 : index
    %0 = vector.load %arg1[%c0, %c0_0] : memref<8x192xbf16, #tpu.memory_space<vmem>>, vector<8x192xbf16>
    %c0_1 = arith.constant 0 : index
    %c0_2 = arith.constant 0 : index
    %1 = vector.load %arg2[%c0_1, %c0_2] : memref<192x32xbf16, #tpu.memory_space<vmem>>, vector<192x32xbf16>
    %cst = arith.constant dense<0.000000e+00> : vector<8x32xf32>
    %2 = tpu.matmul %0, %1, %cst {dimension_numbers = #tpu.dot_dimension_numbers<[1], [0], [0], [1], [0, 0, 1, 1], [], []>} : vector<8x192xbf16>, vector<192x32xbf16>, vector<8x32xf32> -> vector<8x32xf32>
    %c0_3 = arith.constant 0 : index
    %c0_4 = arith.constant 0 : index
    %3 = vector.load %arg3[%c0_3, %c0_4] : memref<1x32xf32, #tpu.memory_space<vmem>>, vector<1x32xf32>
    %4 = vector.broadcast %3 : vector<1x32xf32> to vector<8x32xf32>
    %5 = arith.addf %2, %4 : vector<8x32xf32>
    %c0_5 = arith.constant 0 : index
    %c0_6 = arith.constant 0 : index
    %6 = vector.load %arg4[%c0_5, %c0_6] : memref<8x32xf32, #tpu.memory_space<vmem>>, vector<8x32xf32>
    tpu.vector_store %arg4[%c0_5, %c0_6], %5 {strides = array<i32>} : memref<8x32xf32, #tpu.memory_space<vmem>>, vector<8x32xf32>,
    return
  }
  func.func @transform_0(%arg0: i32) -> (i32, i32) {
    %c0_i32 = arith.constant 0 : i32
    %c0_i32_0 = arith.constant 0 : i32
    return %arg0, %c0_i32 : i32, i32
  }
  func.func @transform_1(%arg0: i32) -> (i32, i32) {
    %c0_i32 = arith.constant 0 : i32
    %c0_i32_0 = arith.constant 0 : i32
    %c0_i32_1 = arith.constant 0 : i32
    return %c0_i32, %c0_i32_0 : i32, i32
  }
  func.func @transform_2(%arg0: i32) -> (i32, i32) {
    %c0_i32 = arith.constant 0 : i32
    %c0_i32_0 = arith.constant 0 : i32
    %c0_i32_1 = arith.constant 0 : i32
    return %c0_i32, %c0_i32_0 : i32, i32
  }
  func.func @transform_3(%arg0: i32) -> (i32, i32) {
    %c0_i32 = arith.constant 0 : i32
    %c0_i32_0 = arith.constant 0 : i32
    return %arg0, %c0_i32 : i32, i32
  }
}

module attributes {stable_mosaic.version = 11 : i64} {
  func.func @fused_transformer_kernel(%arg0: i32, %arg1: i32, %arg2: memref<16x32xf32, #tpu.memory_space<vmem>>, %arg3: memref<1x32xf32, #tpu.memory_space<vmem>>, %arg4: memref<1x32xf32, #tpu.memory_space<vmem>>, %arg5: memref<1x1x32xf32, #tpu.memory_space<vmem>>, %arg6: memref<1x1x32xf32, #tpu.memory_space<vmem>>, %arg7: memref<1x32x96xbf16, #tpu.memory_space<vmem>>, %arg8: memref<1x1x96xf32, #tpu.memory_space<vmem>>, %arg9: memref<1x32x32xbf16, #tpu.memory_space<vmem>>, %arg10: memref<1x1x32xf32, #tpu.memory_space<vmem>>, %arg11: memref<1x1x32xf32, #tpu.memory_space<vmem>>, %arg12: memref<1x1x32xf32, #tpu.memory_space<vmem>>, %arg13: memref<1x128x32xbf16, #tpu.memory_space<vmem>>, %arg14: memref<1x1x128xf32, #tpu.memory_space<vmem>>, %arg15: memref<1x128x32xbf16, #tpu.memory_space<vmem>>, %arg16: memref<1x1x32xf32, #tpu.memory_space<vmem>>, %arg17: memref<1x32xf32, #tpu.memory_space<vmem>>, %arg18: memref<1x32xf32, #tpu.memory_space<vmem>>, %arg19: memref<32x16xbf16, #tpu.memory_space<vmem>>, %arg20: memref<16x32xf32, #tpu.memory_space<vmem>>, %arg21: memref<16x32xf32, #tpu.memory_space<vmem>>, %arg22: memref<16x16xf32, #tpu.memory_space<vmem>>, %arg23: memref<16x32xf32, #tpu.memory_space<vmem>>, %arg24: memref<16x96xbf16, #tpu.memory_space<vmem>>, %arg25: memref<16x32xbf16, #tpu.memory_space<vmem>>) attributes {dimension_semantics = [#tpu.dimension_semantics<parallel>, #tpu.dimension_semantics<arbitrary>], iteration_bounds = array<i64: 2, 12>, scalar_prefetch = 0 : i64, scratch_operands = 3 : i64, tpu.core_type = #tpu.core_type<tc>, window_params = [{transform_indices = @transform_0, window_bounds = array<i64: 16, 32>}, {pipeline_mode = #tpu.pipeline_mode<synchronous>, transform_indices = @transform_1, window_bounds = array<i64: 1, 32>}, {pipeline_mode = #tpu.pipeline_mode<synchronous>, transform_indices = @transform_2, window_bounds = array<i64: 1, 32>}, {transform_indices = @transform_3, window_bounds = array<i64: 1, 1, 32>}, {transform_indices = @transform_4, window_bounds = array<i64: 1, 1, 32>}, {transform_indices = @transform_5, window_bounds = array<i64: 1, 32, 96>}, {transform_indices = @transform_6, window_bounds = array<i64: 1, 1, 96>}, {transform_indices = @transform_7, window_bounds = array<i64: 1, 32, 32>}, {transform_indices = @transform_8, window_bounds = array<i64: 1, 1, 32>}, {transform_indices = @transform_9, window_bounds = array<i64: 1, 1, 32>}, {transform_indices = @transform_10, window_bounds = array<i64: 1, 1, 32>}, {transform_indices = @transform_11, window_bounds = array<i64: 1, 128, 32>}, {transform_indices = @transform_12, window_bounds = array<i64: 1, 1, 128>}, {transform_indices = @transform_13, window_bounds = array<i64: 1, 128, 32>}, {transform_indices = @transform_14, window_bounds = array<i64: 1, 1, 32>}, {pipeline_mode = #tpu.pipeline_mode<synchronous>, transform_indices = @transform_15, window_bounds = array<i64: 1, 32>}, {pipeline_mode = #tpu.pipeline_mode<synchronous>, transform_indices = @transform_16, window_bounds = array<i64: 1, 32>}, {pipeline_mode = #tpu.pipeline_mode<synchronous>, transform_indices = @transform_17, window_bounds = array<i64: 32, 16>}, {transform_indices = @transform_18, window_bounds = array<i64: 16, 32>}, {transform_indices = @transform_19, window_bounds = array<i64: 16, 32>}, {transform_indices = @transform_20, window_bounds = array<i64: 16, 16>}]} {
    %c0_i32 = arith.constant 0 : i32
    %0 = arith.cmpi eq, %arg1, %c0_i32 : i32
    %1 = arith.extui %0 : i1 to i32
    %c0_i32_0 = arith.constant 0 : i32
    %2 = arith.cmpi ne, %1, %c0_i32_0 : i32
    scf.if %2 {
      %c0_103 = arith.constant 0 : index
      %c0_104 = arith.constant 0 : index
      %192 = vector.load %arg2[%c0_103, %c0_104] : memref<16x32xf32, #tpu.memory_space<vmem>>, vector<16x32xf32>
      %c0_105 = arith.constant 0 : index
      %c0_106 = arith.constant 0 : index
      %193 = vector.load %arg3[%c0_105, %c0_106] : memref<1x32xf32, #tpu.memory_space<vmem>>, vector<1x32xf32>
      %c0_107 = arith.constant 0 : index
      %c0_108 = arith.constant 0 : index
      %194 = vector.load %arg4[%c0_107, %c0_108] : memref<1x32xf32, #tpu.memory_space<vmem>>, vector<1x32xf32>
      %cst_109 = arith.constant dense<0.000000e+00> : vector<16xf32>
      %195 = vector.multi_reduction <add>, %192, %cst_109 [1] : vector<16x32xf32> to vector<16xf32>
      %196 = vector.shape_cast %195 : vector<16xf32> to vector<16x1xf32>
      %cst_110 = arith.constant 3.200000e+01 : f32
      %197 = vector.broadcast %cst_110 : f32 to vector<16x1xf32>
      %198 = arith.divf %196, %197 : vector<16x1xf32>
      %199 = vector.broadcast %198 : vector<16x1xf32> to vector<16x32xf32>
      %200 = arith.subf %192, %199 : vector<16x32xf32>
      %201 = arith.mulf %200, %200 : vector<16x32xf32>
      %cst_111 = arith.constant dense<0.000000e+00> : vector<16xf32>
      %202 = vector.multi_reduction <add>, %201, %cst_111 [1] : vector<16x32xf32> to vector<16xf32>
      %203 = vector.shape_cast %202 : vector<16xf32> to vector<16x1xf32>
      %cst_112 = arith.constant 3.200000e+01 : f32
      %204 = vector.broadcast %cst_112 : f32 to vector<16x1xf32>
      %205 = arith.divf %203, %204 : vector<16x1xf32>
      %206 = vector.broadcast %198 : vector<16x1xf32> to vector<16x32xf32>
      %207 = arith.subf %192, %206 : vector<16x32xf32>
      %cst_113 = arith.constant 9.99999974E-6 : f32
      %208 = vector.broadcast %cst_113 : f32 to vector<16x1xf32>
      %209 = arith.addf %205, %208 : vector<16x1xf32>
      %210 = math.rsqrt %209 : vector<16x1xf32>
      %211 = vector.broadcast %210 : vector<16x1xf32> to vector<16x32xf32>
      %212 = arith.mulf %207, %211 : vector<16x32xf32>
      %213 = vector.broadcast %193 : vector<1x32xf32> to vector<16x32xf32>
      %214 = arith.mulf %212, %213 : vector<16x32xf32>
      %215 = vector.broadcast %194 : vector<1x32xf32> to vector<16x32xf32>
      %216 = arith.addf %214, %215 : vector<16x32xf32>
      %c0_114 = arith.constant 0 : index
      %c0_115 = arith.constant 0 : index
      %217 = vector.load %arg23[%c0_114, %c0_115] : memref<16x32xf32, #tpu.memory_space<vmem>>, vector<16x32xf32>
      tpu.vector_store %arg23[%c0_114, %c0_115], %216 {strides = array<i32>} : memref<16x32xf32, #tpu.memory_space<vmem>>, vector<16x32xf32>,
    } else {
    }
    %c0 = arith.constant 0 : index
    %c0_1 = arith.constant 0 : index
    %3 = vector.load %arg23[%c0, %c0_1] : memref<16x32xf32, #tpu.memory_space<vmem>>, vector<16x32xf32>
    %c0_2 = arith.constant 0 : index
    %c0_3 = arith.constant 0 : index
    %c0_4 = arith.constant 0 : index
    %4 = vector.load %arg5[%c0_2, %c0_3, %c0_4] : memref<1x1x32xf32, #tpu.memory_space<vmem>>, vector<1x1x32xf32>
    %5 = vector.shape_cast %4 : vector<1x1x32xf32> to vector<1x32xf32>
    %c0_5 = arith.constant 0 : index
    %c0_6 = arith.constant 0 : index
    %c0_7 = arith.constant 0 : index
    %6 = vector.load %arg6[%c0_5, %c0_6, %c0_7] : memref<1x1x32xf32, #tpu.memory_space<vmem>>, vector<1x1x32xf32>
    %7 = vector.shape_cast %6 : vector<1x1x32xf32> to vector<1x32xf32>
    %cst = arith.constant dense<0.000000e+00> : vector<16xf32>
    %8 = vector.multi_reduction <add>, %3, %cst [1] : vector<16x32xf32> to vector<16xf32>
    %9 = vector.shape_cast %8 : vector<16xf32> to vector<16x1xf32>
    %cst_8 = arith.constant 3.200000e+01 : f32
    %10 = vector.broadcast %cst_8 : f32 to vector<16x1xf32>
    %11 = arith.divf %9, %10 : vector<16x1xf32>
    %12 = vector.broadcast %11 : vector<16x1xf32> to vector<16x32xf32>
    %13 = arith.subf %3, %12 : vector<16x32xf32>
    %14 = arith.mulf %13, %13 : vector<16x32xf32>
    %cst_9 = arith.constant dense<0.000000e+00> : vector<16xf32>
    %15 = vector.multi_reduction <add>, %14, %cst_9 [1] : vector<16x32xf32> to vector<16xf32>
    %16 = vector.shape_cast %15 : vector<16xf32> to vector<16x1xf32>
    %cst_10 = arith.constant 3.200000e+01 : f32
    %17 = vector.broadcast %cst_10 : f32 to vector<16x1xf32>
    %18 = arith.divf %16, %17 : vector<16x1xf32>
    %19 = vector.broadcast %11 : vector<16x1xf32> to vector<16x32xf32>
    %20 = arith.subf %3, %19 : vector<16x32xf32>
    %cst_11 = arith.constant 9.99999974E-6 : f32
    %21 = vector.broadcast %cst_11 : f32 to vector<16x1xf32>
    %22 = arith.addf %18, %21 : vector<16x1xf32>
    %23 = math.rsqrt %22 : vector<16x1xf32>
    %24 = vector.broadcast %23 : vector<16x1xf32> to vector<16x32xf32>
    %25 = arith.mulf %20, %24 : vector<16x32xf32>
    %26 = vector.broadcast %5 : vector<1x32xf32> to vector<16x32xf32>
    %27 = arith.mulf %25, %26 : vector<16x32xf32>
    %28 = vector.broadcast %7 : vector<1x32xf32> to vector<16x32xf32>
    %29 = arith.addf %27, %28 : vector<16x32xf32>
    %30 = arith.truncf %29 : vector<16x32xf32> to vector<16x32xbf16>
    %c0_12 = arith.constant 0 : index
    %c0_13 = arith.constant 0 : index
    %c0_14 = arith.constant 0 : index
    %31 = vector.load %arg7[%c0_12, %c0_13, %c0_14] : memref<1x32x96xbf16, #tpu.memory_space<vmem>>, vector<1x32x96xbf16>
    %32 = vector.shape_cast %31 : vector<1x32x96xbf16> to vector<32x96xbf16>
    %cst_15 = arith.constant dense<0.000000e+00> : vector<16x96xf32>
    %33 = tpu.matmul %30, %32, %cst_15 {dimension_numbers = #tpu.dot_dimension_numbers<[1], [0], [0], [1], [0, 0, 1, 1], [], []>} : vector<16x32xbf16>, vector<32x96xbf16>, vector<16x96xf32> -> vector<16x96xf32>
    %c0_16 = arith.constant 0 : index
    %c0_17 = arith.constant 0 : index
    %c0_18 = arith.constant 0 : index
    %34 = vector.load %arg8[%c0_16, %c0_17, %c0_18] : memref<1x1x96xf32, #tpu.memory_space<vmem>>, vector<1x1x96xf32>
    %35 = vector.shape_cast %34 : vector<1x1x96xf32> to vector<1x96xf32>
    %36 = vector.broadcast %35 : vector<1x96xf32> to vector<16x96xf32>
    %37 = arith.addf %33, %36 : vector<16x96xf32>
    %38 = arith.truncf %37 : vector<16x96xf32> to vector<16x96xbf16>
    %c0_19 = arith.constant 0 : index
    %c0_20 = arith.constant 0 : index
    %39 = vector.load %arg24[%c0_19, %c0_20] : memref<16x96xbf16, #tpu.memory_space<vmem>>, vector<16x96xbf16>
    tpu.vector_store %arg24[%c0_19, %c0_20], %38 {strides = array<i32>} : memref<16x96xbf16, #tpu.memory_space<vmem>>, vector<16x96xbf16>,
    %40 = tpu.iota {dimensions = array<i32: 1>} : vector<16x16xi32>
    %c5_i32 = arith.constant 5 : i32
    %41 = vector.broadcast %c5_i32 : i32 to vector<16x16xi32>
    %42 = arith.cmpi slt, %40, %41 : vector<16x16xi32>
    %c0_21 = arith.constant 0 : index
    %c0_22 = arith.constant 0 : index
    %43 = vector.load %arg24[%c0_21, %c0_22] : memref<16x96xbf16, #tpu.memory_space<vmem>>, vector<16x8xbf16>
    %c0_23 = arith.constant 0 : index
    %c32 = arith.constant 32 : index
    %44 = vector.load %arg24[%c0_23, %c32] : memref<16x96xbf16, #tpu.memory_space<vmem>>, vector<16x8xbf16>
    %c0_24 = arith.constant 0 : index
    %c64 = arith.constant 64 : index
    %45 = vector.load %arg24[%c0_24, %c64] : memref<16x96xbf16, #tpu.memory_space<vmem>>, vector<16x8xbf16>
    %cst_25 = arith.constant dense<0.000000e+00> : vector<16x16xf32>
    %46 = tpu.matmul %43, %44, %cst_25 {dimension_numbers = #tpu.dot_dimension_numbers<[1], [1], [0], [0], [0, 0, 1, 0], [], []>} : vector<16x8xbf16>, vector<16x8xbf16>, vector<16x16xf32> -> vector<16x16xf32>
    %cst_26 = arith.constant -1.000000e+30 : f32
    %47 = vector.broadcast %cst_26 : f32 to vector<16x16xf32>
    %48 = arith.select %42, %46, %47 : vector<16x16xi1>, vector<16x16xf32>
    %cst_27 = arith.constant dense<0xFF800000> : vector<16xf32>
    %49 = vector.multi_reduction <maximumf>, %48, %cst_27 [1] : vector<16x16xf32> to vector<16xf32>
    %50 = vector.shape_cast %49 : vector<16xf32> to vector<16x1xf32>
    %51 = vector.broadcast %50 : vector<16x1xf32> to vector<16x16xf32>
    %52 = arith.subf %48, %51 : vector<16x16xf32>
    %53 = math.exp %52 : vector<16x16xf32>
    %cst_28 = arith.constant dense<0.000000e+00> : vector<16xf32>
    %54 = vector.multi_reduction <add>, %53, %cst_28 [1] : vector<16x16xf32> to vector<16xf32>
    %55 = vector.shape_cast %54 : vector<16xf32> to vector<16x1xf32>
    %56 = tpu.reciprocal %55 {approx = true} : vector<16x1xf32> -> vector<16x1xf32>
    %57 = vector.broadcast %56 : vector<16x1xf32> to vector<16x16xf32>
    %58 = arith.mulf %53, %57 : vector<16x16xf32>
    %59 = arith.truncf %58 : vector<16x16xf32> to vector<16x16xbf16>
    %cst_29 = arith.constant dense<0.000000e+00> : vector<16x8xf32>
    %60 = tpu.matmul %59, %45, %cst_29 {dimension_numbers = #tpu.dot_dimension_numbers<[1], [0], [0], [1], [0, 0, 1, 1], [], []>} : vector<16x16xbf16>, vector<16x8xbf16>, vector<16x8xf32> -> vector<16x8xf32>
    %61 = arith.truncf %60 : vector<16x8xf32> to vector<16x8xbf16>
    %c0_30 = arith.constant 0 : index
    %c0_31 = arith.constant 0 : index
    %62 = vector.load %arg25[%c0_30, %c0_31] : memref<16x32xbf16, #tpu.memory_space<vmem>>, vector<16x8xbf16>
    tpu.vector_store %arg25[%c0_30, %c0_31], %61 {strides = array<i32>} : memref<16x32xbf16, #tpu.memory_space<vmem>>, vector<16x8xbf16>,
    %c0_32 = arith.constant 0 : index
    %c8 = arith.constant 8 : index
    %63 = vector.load %arg24[%c0_32, %c8] : memref<16x96xbf16, #tpu.memory_space<vmem>>, vector<16x8xbf16>
    %c0_33 = arith.constant 0 : index
    %c40 = arith.constant 40 : index
    %64 = vector.load %arg24[%c0_33, %c40] : memref<16x96xbf16, #tpu.memory_space<vmem>>, vector<16x8xbf16>
    %c0_34 = arith.constant 0 : index
    %c72 = arith.constant 72 : index
    %65 = vector.load %arg24[%c0_34, %c72] : memref<16x96xbf16, #tpu.memory_space<vmem>>, vector<16x8xbf16>
    %cst_35 = arith.constant dense<0.000000e+00> : vector<16x16xf32>
    %66 = tpu.matmul %63, %64, %cst_35 {dimension_numbers = #tpu.dot_dimension_numbers<[1], [1], [0], [0], [0, 0, 1, 0], [], []>} : vector<16x8xbf16>, vector<16x8xbf16>, vector<16x16xf32> -> vector<16x16xf32>
    %cst_36 = arith.constant -1.000000e+30 : f32
    %67 = vector.broadcast %cst_36 : f32 to vector<16x16xf32>
    %68 = arith.select %42, %66, %67 : vector<16x16xi1>, vector<16x16xf32>
    %cst_37 = arith.constant dense<0xFF800000> : vector<16xf32>
    %69 = vector.multi_reduction <maximumf>, %68, %cst_37 [1] : vector<16x16xf32> to vector<16xf32>
    %70 = vector.shape_cast %69 : vector<16xf32> to vector<16x1xf32>
    %71 = vector.broadcast %70 : vector<16x1xf32> to vector<16x16xf32>
    %72 = arith.subf %68, %71 : vector<16x16xf32>
    %73 = math.exp %72 : vector<16x16xf32>
    %cst_38 = arith.constant dense<0.000000e+00> : vector<16xf32>
    %74 = vector.multi_reduction <add>, %73, %cst_38 [1] : vector<16x16xf32> to vector<16xf32>
    %75 = vector.shape_cast %74 : vector<16xf32> to vector<16x1xf32>
    %76 = tpu.reciprocal %75 {approx = true} : vector<16x1xf32> -> vector<16x1xf32>
    %77 = vector.broadcast %76 : vector<16x1xf32> to vector<16x16xf32>
    %78 = arith.mulf %73, %77 : vector<16x16xf32>
    %79 = arith.truncf %78 : vector<16x16xf32> to vector<16x16xbf16>
    %cst_39 = arith.constant dense<0.000000e+00> : vector<16x8xf32>
    %80 = tpu.matmul %79, %65, %cst_39 {dimension_numbers = #tpu.dot_dimension_numbers<[1], [0], [0], [1], [0, 0, 1, 1], [], []>} : vector<16x16xbf16>, vector<16x8xbf16>, vector<16x8xf32> -> vector<16x8xf32>
    %81 = arith.truncf %80 : vector<16x8xf32> to vector<16x8xbf16>
    %c0_40 = arith.constant 0 : index
    %c8_41 = arith.constant 8 : index
    %82 = vector.load %arg25[%c0_40, %c8_41] : memref<16x32xbf16, #tpu.memory_space<vmem>>, vector<16x8xbf16>
    tpu.vector_store %arg25[%c0_40, %c8_41], %81 {strides = array<i32>} : memref<16x32xbf16, #tpu.memory_space<vmem>>, vector<16x8xbf16>,
    %c0_42 = arith.constant 0 : index
    %c16 = arith.constant 16 : index
    %83 = vector.load %arg24[%c0_42, %c16] : memref<16x96xbf16, #tpu.memory_space<vmem>>, vector<16x8xbf16>
    %c0_43 = arith.constant 0 : index
    %c48 = arith.constant 48 : index
    %84 = vector.load %arg24[%c0_43, %c48] : memref<16x96xbf16, #tpu.memory_space<vmem>>, vector<16x8xbf16>
    %c0_44 = arith.constant 0 : index
    %c80 = arith.constant 80 : index
    %85 = vector.load %arg24[%c0_44, %c80] : memref<16x96xbf16, #tpu.memory_space<vmem>>, vector<16x8xbf16>
    %cst_45 = arith.constant dense<0.000000e+00> : vector<16x16xf32>
    %86 = tpu.matmul %83, %84, %cst_45 {dimension_numbers = #tpu.dot_dimension_numbers<[1], [1], [0], [0], [0, 0, 1, 0], [], []>} : vector<16x8xbf16>, vector<16x8xbf16>, vector<16x16xf32> -> vector<16x16xf32>
    %cst_46 = arith.constant -1.000000e+30 : f32
    %87 = vector.broadcast %cst_46 : f32 to vector<16x16xf32>
    %88 = arith.select %42, %86, %87 : vector<16x16xi1>, vector<16x16xf32>
    %cst_47 = arith.constant dense<0xFF800000> : vector<16xf32>
    %89 = vector.multi_reduction <maximumf>, %88, %cst_47 [1] : vector<16x16xf32> to vector<16xf32>
    %90 = vector.shape_cast %89 : vector<16xf32> to vector<16x1xf32>
    %91 = vector.broadcast %90 : vector<16x1xf32> to vector<16x16xf32>
    %92 = arith.subf %88, %91 : vector<16x16xf32>
    %93 = math.exp %92 : vector<16x16xf32>
    %cst_48 = arith.constant dense<0.000000e+00> : vector<16xf32>
    %94 = vector.multi_reduction <add>, %93, %cst_48 [1] : vector<16x16xf32> to vector<16xf32>
    %95 = vector.shape_cast %94 : vector<16xf32> to vector<16x1xf32>
    %96 = tpu.reciprocal %95 {approx = true} : vector<16x1xf32> -> vector<16x1xf32>
    %97 = vector.broadcast %96 : vector<16x1xf32> to vector<16x16xf32>
    %98 = arith.mulf %93, %97 : vector<16x16xf32>
    %99 = arith.truncf %98 : vector<16x16xf32> to vector<16x16xbf16>
    %cst_49 = arith.constant dense<0.000000e+00> : vector<16x8xf32>
    %100 = tpu.matmul %99, %85, %cst_49 {dimension_numbers = #tpu.dot_dimension_numbers<[1], [0], [0], [1], [0, 0, 1, 1], [], []>} : vector<16x16xbf16>, vector<16x8xbf16>, vector<16x8xf32> -> vector<16x8xf32>
    %101 = arith.truncf %100 : vector<16x8xf32> to vector<16x8xbf16>
    %c0_50 = arith.constant 0 : index
    %c16_51 = arith.constant 16 : index
    %102 = vector.load %arg25[%c0_50, %c16_51] : memref<16x32xbf16, #tpu.memory_space<vmem>>, vector<16x8xbf16>
    tpu.vector_store %arg25[%c0_50, %c16_51], %101 {strides = array<i32>} : memref<16x32xbf16, #tpu.memory_space<vmem>>, vector<16x8xbf16>,
    %c0_52 = arith.constant 0 : index
    %c24 = arith.constant 24 : index
    %103 = vector.load %arg24[%c0_52, %c24] : memref<16x96xbf16, #tpu.memory_space<vmem>>, vector<16x8xbf16>
    %c0_53 = arith.constant 0 : index
    %c56 = arith.constant 56 : index
    %104 = vector.load %arg24[%c0_53, %c56] : memref<16x96xbf16, #tpu.memory_space<vmem>>, vector<16x8xbf16>
    %c0_54 = arith.constant 0 : index
    %c88 = arith.constant 88 : index
    %105 = vector.load %arg24[%c0_54, %c88] : memref<16x96xbf16, #tpu.memory_space<vmem>>, vector<16x8xbf16>
    %cst_55 = arith.constant dense<0.000000e+00> : vector<16x16xf32>
    %106 = tpu.matmul %103, %104, %cst_55 {dimension_numbers = #tpu.dot_dimension_numbers<[1], [1], [0], [0], [0, 0, 1, 0], [], []>} : vector<16x8xbf16>, vector<16x8xbf16>, vector<16x16xf32> -> vector<16x16xf32>
    %cst_56 = arith.constant -1.000000e+30 : f32
    %107 = vector.broadcast %cst_56 : f32 to vector<16x16xf32>
    %108 = arith.select %42, %106, %107 : vector<16x16xi1>, vector<16x16xf32>
    %cst_57 = arith.constant dense<0xFF800000> : vector<16xf32>
    %109 = vector.multi_reduction <maximumf>, %108, %cst_57 [1] : vector<16x16xf32> to vector<16xf32>
    %110 = vector.shape_cast %109 : vector<16xf32> to vector<16x1xf32>
    %111 = vector.broadcast %110 : vector<16x1xf32> to vector<16x16xf32>
    %112 = arith.subf %108, %111 : vector<16x16xf32>
    %113 = math.exp %112 : vector<16x16xf32>
    %cst_58 = arith.constant dense<0.000000e+00> : vector<16xf32>
    %114 = vector.multi_reduction <add>, %113, %cst_58 [1] : vector<16x16xf32> to vector<16xf32>
    %115 = vector.shape_cast %114 : vector<16xf32> to vector<16x1xf32>
    %116 = tpu.reciprocal %115 {approx = true} : vector<16x1xf32> -> vector<16x1xf32>
    %117 = vector.broadcast %116 : vector<16x1xf32> to vector<16x16xf32>
    %118 = arith.mulf %113, %117 : vector<16x16xf32>
    %119 = arith.truncf %118 : vector<16x16xf32> to vector<16x16xbf16>
    %cst_59 = arith.constant dense<0.000000e+00> : vector<16x8xf32>
    %120 = tpu.matmul %119, %105, %cst_59 {dimension_numbers = #tpu.dot_dimension_numbers<[1], [0], [0], [1], [0, 0, 1, 1], [], []>} : vector<16x16xbf16>, vector<16x8xbf16>, vector<16x8xf32> -> vector<16x8xf32>
    %121 = arith.truncf %120 : vector<16x8xf32> to vector<16x8xbf16>
    %c0_60 = arith.constant 0 : index
    %c24_61 = arith.constant 24 : index
    %122 = vector.load %arg25[%c0_60, %c24_61] : memref<16x32xbf16, #tpu.memory_space<vmem>>, vector<16x8xbf16>
    tpu.vector_store %arg25[%c0_60, %c24_61], %121 {strides = array<i32>} : memref<16x32xbf16, #tpu.memory_space<vmem>>, vector<16x8xbf16>,
    %c0_62 = arith.constant 0 : index
    %c0_63 = arith.constant 0 : index
    %123 = vector.load %arg25[%c0_62, %c0_63] : memref<16x32xbf16, #tpu.memory_space<vmem>>, vector<16x32xbf16>
    %c0_64 = arith.constant 0 : index
    %c0_65 = arith.constant 0 : index
    %c0_66 = arith.constant 0 : index
    %124 = vector.load %arg9[%c0_64, %c0_65, %c0_66] : memref<1x32x32xbf16, #tpu.memory_space<vmem>>, vector<1x32x32xbf16>
    %125 = vector.shape_cast %124 : vector<1x32x32xbf16> to vector<32x32xbf16>
    %cst_67 = arith.constant dense<0.000000e+00> : vector<16x32xf32>
    %126 = tpu.matmul %123, %125, %cst_67 {dimension_numbers = #tpu.dot_dimension_numbers<[1], [0], [0], [1], [0, 0, 1, 1], [], []>} : vector<16x32xbf16>, vector<32x32xbf16>, vector<16x32xf32> -> vector<16x32xf32>
    %c0_68 = arith.constant 0 : index
    %c0_69 = arith.constant 0 : index
    %c0_70 = arith.constant 0 : index
    %127 = vector.load %arg10[%c0_68, %c0_69, %c0_70] : memref<1x1x32xf32, #tpu.memory_space<vmem>>, vector<1x1x32xf32>
    %128 = vector.shape_cast %127 : vector<1x1x32xf32> to vector<1x32xf32>
    %129 = vector.broadcast %128 : vector<1x32xf32> to vector<16x32xf32>
    %130 = arith.addf %126, %129 : vector<16x32xf32>
    %131 = arith.addf %3, %130 : vector<16x32xf32>
    %c0_71 = arith.constant 0 : index
    %c0_72 = arith.constant 0 : index
    %c0_73 = arith.constant 0 : index
    %132 = vector.load %arg11[%c0_71, %c0_72, %c0_73] : memref<1x1x32xf32, #tpu.memory_space<vmem>>, vector<1x1x32xf32>
    %133 = vector.shape_cast %132 : vector<1x1x32xf32> to vector<1x32xf32>
    %c0_74 = arith.constant 0 : index
    %c0_75 = arith.constant 0 : index
    %c0_76 = arith.constant 0 : index
    %134 = vector.load %arg12[%c0_74, %c0_75, %c0_76] : memref<1x1x32xf32, #tpu.memory_space<vmem>>, vector<1x1x32xf32>
    %135 = vector.shape_cast %134 : vector<1x1x32xf32> to vector<1x32xf32>
    %cst_77 = arith.constant dense<0.000000e+00> : vector<16xf32>
    %136 = vector.multi_reduction <add>, %131, %cst_77 [1] : vector<16x32xf32> to vector<16xf32>
    %137 = vector.shape_cast %136 : vector<16xf32> to vector<16x1xf32>
    %cst_78 = arith.constant 3.200000e+01 : f32
    %138 = vector.broadcast %cst_78 : f32 to vector<16x1xf32>
    %139 = arith.divf %137, %138 : vector<16x1xf32>
    %140 = vector.broadcast %139 : vector<16x1xf32> to vector<16x32xf32>
    %141 = arith.subf %131, %140 : vector<16x32xf32>
    %142 = arith.mulf %141, %141 : vector<16x32xf32>
    %cst_79 = arith.constant dense<0.000000e+00> : vector<16xf32>
    %143 = vector.multi_reduction <add>, %142, %cst_79 [1] : vector<16x32xf32> to vector<16xf32>
    %144 = vector.shape_cast %143 : vector<16xf32> to vector<16x1xf32>
    %cst_80 = arith.constant 3.200000e+01 : f32
    %145 = vector.broadcast %cst_80 : f32 to vector<16x1xf32>
    %146 = arith.divf %144, %145 : vector<16x1xf32>
    %147 = vector.broadcast %139 : vector<16x1xf32> to vector<16x32xf32>
    %148 = arith.subf %131, %147 : vector<16x32xf32>
    %cst_81 = arith.constant 9.99999974E-6 : f32
    %149 = vector.broadcast %cst_81 : f32 to vector<16x1xf32>
    %150 = arith.addf %146, %149 : vector<16x1xf32>
    %151 = math.rsqrt %150 : vector<16x1xf32>
    %152 = vector.broadcast %151 : vector<16x1xf32> to vector<16x32xf32>
    %153 = arith.mulf %148, %152 : vector<16x32xf32>
    %154 = vector.broadcast %133 : vector<1x32xf32> to vector<16x32xf32>
    %155 = arith.mulf %153, %154 : vector<16x32xf32>
    %156 = vector.broadcast %135 : vector<1x32xf32> to vector<16x32xf32>
    %157 = arith.addf %155, %156 : vector<16x32xf32>
    %158 = arith.truncf %157 : vector<16x32xf32> to vector<16x32xbf16>
    %cst_82 = arith.constant 0.000000e+00 : f32
    %159 = vector.broadcast %cst_82 : f32 to vector<16x32xf32>
    %c0_83 = arith.constant 0 : index
    %c0_84 = arith.constant 0 : index
    %c0_85 = arith.constant 0 : index
    %160 = vector.load %arg13[%c0_83, %c0_84, %c0_85] : memref<1x128x32xbf16, #tpu.memory_space<vmem>>, vector<1x128x32xbf16>
    %161 = vector.shape_cast %160 : vector<1x128x32xbf16> to vector<128x32xbf16>
    %cst_86 = arith.constant dense<0.000000e+00> : vector<16x128xf32>
    %162 = tpu.matmul %158, %161, %cst_86 {dimension_numbers = #tpu.dot_dimension_numbers<[1], [1], [0], [0], [0, 0, 1, 0], [], []>} : vector<16x32xbf16>, vector<128x32xbf16>, vector<16x128xf32> -> vector<16x128xf32>
    %c0_87 = arith.constant 0 : index
    %c0_88 = arith.constant 0 : index
    %c0_89 = arith.constant 0 : index
    %163 = vector.load %arg14[%c0_87, %c0_88, %c0_89] : memref<1x1x128xf32, #tpu.memory_space<vmem>>, vector<1x1x128xf32>
    %164 = vector.shape_cast %163 : vector<1x1x128xf32> to vector<1x128xf32>
    %165 = vector.broadcast %164 : vector<1x128xf32> to vector<16x128xf32>
    %166 = arith.addf %162, %165 : vector<16x128xf32>
    %cst_90 = arith.constant 1.702000e+00 : f32
    %167 = vector.broadcast %cst_90 : f32 to vector<16x128xf32>
    %168 = arith.mulf %167, %166 : vector<16x128xf32>
    %169 = arith.negf %168 : vector<16x128xf32>
    %170 = math.exp %169 : vector<16x128xf32>
    %cst_91 = arith.constant 1.000000e+00 : f32
    %171 = vector.broadcast %cst_91 : f32 to vector<16x128xf32>
    %172 = arith.addf %171, %170 : vector<16x128xf32>
    %173 = arith.divf %171, %172 : vector<16x128xf32>
    %174 = arith.mulf %166, %173 : vector<16x128xf32>
    %175 = arith.truncf %174 : vector<16x128xf32> to vector<16x128xbf16>
    %c0_92 = arith.constant 0 : index
    %c0_93 = arith.constant 0 : index
    %c0_94 = arith.constant 0 : index
    %176 = vector.load %arg15[%c0_92, %c0_93, %c0_94] : memref<1x128x32xbf16, #tpu.memory_space<vmem>>, vector<1x128x32xbf16>
    %177 = vector.shape_cast %176 : vector<1x128x32xbf16> to vector<128x32xbf16>
    %cst_95 = arith.constant dense<0.000000e+00> : vector<16x32xf32>
    %178 = tpu.matmul %175, %177, %cst_95 {dimension_numbers = #tpu.dot_dimension_numbers<[1], [0], [0], [1], [0, 0, 1, 1], [], []>} : vector<16x128xbf16>, vector<128x32xbf16>, vector<16x32xf32> -> vector<16x32xf32>
    %179 = arith.addf %159, %178 : vector<16x32xf32>
    %180 = arith.addf %131, %179 : vector<16x32xf32>
    %c0_96 = arith.constant 0 : index
    %c0_97 = arith.constant 0 : index
    %c0_98 = arith.constant 0 : index
    %181 = vector.load %arg16[%c0_96, %c0_97, %c0_98] : memref<1x1x32xf32, #tpu.memory_space<vmem>>, vector<1x1x32xf32>
    %182 = vector.shape_cast %181 : vector<1x1x32xf32> to vector<1x32xf32>
    %183 = vector.broadcast %182 : vector<1x32xf32> to vector<16x32xf32>
    %184 = arith.addf %180, %183 : vector<16x32xf32>
    %c0_99 = arith.constant 0 : index
    %c0_100 = arith.constant 0 : index
    %185 = vector.load %arg23[%c0_99, %c0_100] : memref<16x32xf32, #tpu.memory_space<vmem>>, vector<16x32xf32>
    tpu.vector_store %arg23[%c0_99, %c0_100], %184 {strides = array<i32>} : memref<16x32xf32, #tpu.memory_space<vmem>>, vector<16x32xf32>,
    %c10_i32 = arith.constant 10 : i32
    %186 = arith.cmpi eq, %arg1, %c10_i32 : i32
    %187 = arith.extui %186 : i1 to i32
    %c0_i32_101 = arith.constant 0 : i32
    %188 = arith.cmpi ne, %187, %c0_i32_101 : i32
    scf.if %188 {
      %c0_103 = arith.constant 0 : index
      %c0_104 = arith.constant 0 : index
      %192 = vector.load %arg20[%c0_103, %c0_104] : memref<16x32xf32, #tpu.memory_space<vmem>>, vector<16x32xf32>
      tpu.vector_store %arg20[%c0_103, %c0_104], %184 {strides = array<i32>} : memref<16x32xf32, #tpu.memory_space<vmem>>, vector<16x32xf32>,
    } else {
    }
    %c11_i32 = arith.constant 11 : i32
    %189 = arith.cmpi eq, %arg1, %c11_i32 : i32
    %190 = arith.extui %189 : i1 to i32
    %c0_i32_102 = arith.constant 0 : i32
    %191 = arith.cmpi ne, %190, %c0_i32_102 : i32
    scf.if %191 {
      %c0_103 = arith.constant 0 : index
      %c0_104 = arith.constant 0 : index
      %192 = vector.load %arg17[%c0_103, %c0_104] : memref<1x32xf32, #tpu.memory_space<vmem>>, vector<1x32xf32>
      %c0_105 = arith.constant 0 : index
      %c0_106 = arith.constant 0 : index
      %193 = vector.load %arg18[%c0_105, %c0_106] : memref<1x32xf32, #tpu.memory_space<vmem>>, vector<1x32xf32>
      %cst_107 = arith.constant dense<0.000000e+00> : vector<16xf32>
      %194 = vector.multi_reduction <add>, %184, %cst_107 [1] : vector<16x32xf32> to vector<16xf32>
      %195 = vector.shape_cast %194 : vector<16xf32> to vector<16x1xf32>
      %cst_108 = arith.constant 3.200000e+01 : f32
      %196 = vector.broadcast %cst_108 : f32 to vector<16x1xf32>
      %197 = arith.divf %195, %196 : vector<16x1xf32>
      %198 = vector.broadcast %197 : vector<16x1xf32> to vector<16x32xf32>
      %199 = arith.subf %184, %198 : vector<16x32xf32>
      %200 = arith.mulf %199, %199 : vector<16x32xf32>
      %cst_109 = arith.constant dense<0.000000e+00> : vector<16xf32>
      %201 = vector.multi_reduction <add>, %200, %cst_109 [1] : vector<16x32xf32> to vector<16xf32>
      %202 = vector.shape_cast %201 : vector<16xf32> to vector<16x1xf32>
      %cst_110 = arith.constant 3.200000e+01 : f32
      %203 = vector.broadcast %cst_110 : f32 to vector<16x1xf32>
      %204 = arith.divf %202, %203 : vector<16x1xf32>
      %205 = vector.broadcast %197 : vector<16x1xf32> to vector<16x32xf32>
      %206 = arith.subf %184, %205 : vector<16x32xf32>
      %cst_111 = arith.constant 9.99999974E-6 : f32
      %207 = vector.broadcast %cst_111 : f32 to vector<16x1xf32>
      %208 = arith.addf %204, %207 : vector<16x1xf32>
      %209 = math.rsqrt %208 : vector<16x1xf32>
      %210 = vector.broadcast %209 : vector<16x1xf32> to vector<16x32xf32>
      %211 = arith.mulf %206, %210 : vector<16x32xf32>
      %212 = vector.broadcast %192 : vector<1x32xf32> to vector<16x32xf32>
      %213 = arith.mulf %211, %212 : vector<16x32xf32>
      %214 = vector.broadcast %193 : vector<1x32xf32> to vector<16x32xf32>
      %215 = arith.addf %213, %214 : vector<16x32xf32>
      %c0_112 = arith.constant 0 : index
      %c0_113 = arith.constant 0 : index
      %216 = vector.load %arg21[%c0_112, %c0_113] : memref<16x32xf32, #tpu.memory_space<vmem>>, vector<16x32xf32>
      tpu.vector_store %arg21[%c0_112, %c0_113], %215 {strides = array<i32>} : memref<16x32xf32, #tpu.memory_space<vmem>>, vector<16x32xf32>,
      %217 = arith.truncf %215 : vector<16x32xf32> to vector<16x32xbf16>
      %c0_114 = arith.constant 0 : index
      %c0_115 = arith.constant 0 : index
      %218 = vector.load %arg19[%c0_114, %c0_115] : memref<32x16xbf16, #tpu.memory_space<vmem>>, vector<32x16xbf16>
      %cst_116 = arith.constant dense<0.000000e+00> : vector<16x16xf32>
      %219 = tpu.matmul %217, %218, %cst_116 {dimension_numbers = #tpu.dot_dimension_numbers<[1], [0], [0], [1], [0, 0, 1, 1], [], []>} : vector<16x32xbf16>, vector<32x16xbf16>, vector<16x16xf32> -> vector<16x16xf32>
      %c0_117 = arith.constant 0 : index
      %c0_118 = arith.constant 0 : index
      %220 = vector.load %arg22[%c0_117, %c0_118] : memref<16x16xf32, #tpu.memory_space<vmem>>, vector<16x16xf32>
      tpu.vector_store %arg22[%c0_117, %c0_118], %219 {strides = array<i32>} : memref<16x16xf32, #tpu.memory_space<vmem>>, vector<16x16xf32>,
    } else {
    }
    return
  }
  func.func @transform_0(%arg0: i32, %arg1: i32) -> (i32, i32) {
    %c0_i32 = arith.constant 0 : i32
    %c0_i32_0 = arith.constant 0 : i32
    return %arg0, %c0_i32 : i32, i32
  }
  func.func @transform_1(%arg0: i32, %arg1: i32) -> (i32, i32) {
    %c0_i32 = arith.constant 0 : i32
    %c0_i32_0 = arith.constant 0 : i32
    %c0_i32_1 = arith.constant 0 : i32
    return %c0_i32, %c0_i32_0 : i32, i32
  }
  func.func @transform_2(%arg0: i32, %arg1: i32) -> (i32, i32) {
    %c0_i32 = arith.constant 0 : i32
    %c0_i32_0 = arith.constant 0 : i32
    %c0_i32_1 = arith.constant 0 : i32
    return %c0_i32, %c0_i32_0 : i32, i32
  }
  func.func @transform_3(%arg0: i32, %arg1: i32) -> (i32, i32, i32) {
    %c0_i32 = arith.constant 0 : i32
    %c0_i32_0 = arith.constant 0 : i32
    %c0_i32_1 = arith.constant 0 : i32
    return %arg1, %c0_i32, %c0_i32_0 : i32, i32, i32
  }
  func.func @transform_4(%arg0: i32, %arg1: i32) -> (i32, i32, i32) {
    %c0_i32 = arith.constant 0 : i32
    %c0_i32_0 = arith.constant 0 : i32
    %c0_i32_1 = arith.constant 0 : i32
    return %arg1, %c0_i32, %c0_i32_0 : i32, i32, i32
  }
  func.func @transform_5(%arg0: i32, %arg1: i32) -> (i32, i32, i32) {
    %c0_i32 = arith.constant 0 : i32
    %c0_i32_0 = arith.constant 0 : i32
    %c0_i32_1 = arith.constant 0 : i32
    return %arg1, %c0_i32, %c0_i32_0 : i32, i32, i32
  }
  func.func @transform_6(%arg0: i32, %arg1: i32) -> (i32, i32, i32) {
    %c0_i32 = arith.constant 0 : i32
    %c0_i32_0 = arith.constant 0 : i32
    %c0_i32_1 = arith.constant 0 : i32
    return %arg1, %c0_i32, %c0_i32_0 : i32, i32, i32
  }
  func.func @transform_7(%arg0: i32, %arg1: i32) -> (i32, i32, i32) {
    %c0_i32 = arith.constant 0 : i32
    %c0_i32_0 = arith.constant 0 : i32
    %c0_i32_1 = arith.constant 0 : i32
    return %arg1, %c0_i32, %c0_i32_0 : i32, i32, i32
  }
  func.func @transform_8(%arg0: i32, %arg1: i32) -> (i32, i32, i32) {
    %c0_i32 = arith.constant 0 : i32
    %c0_i32_0 = arith.constant 0 : i32
    %c0_i32_1 = arith.constant 0 : i32
    return %arg1, %c0_i32, %c0_i32_0 : i32, i32, i32
  }
  func.func @transform_9(%arg0: i32, %arg1: i32) -> (i32, i32, i32) {
    %c0_i32 = arith.constant 0 : i32
    %c0_i32_0 = arith.constant 0 : i32
    %c0_i32_1 = arith.constant 0 : i32
    return %arg1, %c0_i32, %c0_i32_0 : i32, i32, i32
  }
  func.func @transform_10(%arg0: i32, %arg1: i32) -> (i32, i32, i32) {
    %c0_i32 = arith.constant 0 : i32
    %c0_i32_0 = arith.constant 0 : i32
    %c0_i32_1 = arith.constant 0 : i32
    return %arg1, %c0_i32, %c0_i32_0 : i32, i32, i32
  }
  func.func @transform_11(%arg0: i32, %arg1: i32) -> (i32, i32, i32) {
    %c0_i32 = arith.constant 0 : i32
    %c0_i32_0 = arith.constant 0 : i32
    %c0_i32_1 = arith.constant 0 : i32
    return %arg1, %c0_i32, %c0_i32_0 : i32, i32, i32
  }
  func.func @transform_12(%arg0: i32, %arg1: i32) -> (i32, i32, i32) {
    %c0_i32 = arith.constant 0 : i32
    %c0_i32_0 = arith.constant 0 : i32
    %c0_i32_1 = arith.constant 0 : i32
    return %arg1, %c0_i32, %c0_i32_0 : i32, i32, i32
  }
  func.func @transform_13(%arg0: i32, %arg1: i32) -> (i32, i32, i32) {
    %c0_i32 = arith.constant 0 : i32
    %c0_i32_0 = arith.constant 0 : i32
    %c0_i32_1 = arith.constant 0 : i32
    return %arg1, %c0_i32, %c0_i32_0 : i32, i32, i32
  }
  func.func @transform_14(%arg0: i32, %arg1: i32) -> (i32, i32, i32) {
    %c0_i32 = arith.constant 0 : i32
    %c0_i32_0 = arith.constant 0 : i32
    %c0_i32_1 = arith.constant 0 : i32
    return %arg1, %c0_i32, %c0_i32_0 : i32, i32, i32
  }
  func.func @transform_15(%arg0: i32, %arg1: i32) -> (i32, i32) {
    %c0_i32 = arith.constant 0 : i32
    %c0_i32_0 = arith.constant 0 : i32
    %c0_i32_1 = arith.constant 0 : i32
    return %c0_i32, %c0_i32_0 : i32, i32
  }
  func.func @transform_16(%arg0: i32, %arg1: i32) -> (i32, i32) {
    %c0_i32 = arith.constant 0 : i32
    %c0_i32_0 = arith.constant 0 : i32
    %c0_i32_1 = arith.constant 0 : i32
    return %c0_i32, %c0_i32_0 : i32, i32
  }
  func.func @transform_17(%arg0: i32, %arg1: i32) -> (i32, i32) {
    %c0_i32 = arith.constant 0 : i32
    %c0_i32_0 = arith.constant 0 : i32
    %c0_i32_1 = arith.constant 0 : i32
    return %c0_i32, %c0_i32_0 : i32, i32
  }
  func.func @transform_18(%arg0: i32, %arg1: i32) -> (i32, i32) {
    %c0_i32 = arith.constant 0 : i32
    %c0_i32_0 = arith.constant 0 : i32
    return %arg0, %c0_i32 : i32, i32
  }
  func.func @transform_19(%arg0: i32, %arg1: i32) -> (i32, i32) {
    %c0_i32 = arith.constant 0 : i32
    %c0_i32_0 = arith.constant 0 : i32
    return %arg0, %c0_i32 : i32, i32
  }
  func.func @transform_20(%arg0: i32, %arg1: i32) -> (i32, i32) {
    %c0_i32 = arith.constant 0 : i32
    %c0_i32_0 = arith.constant 0 : i32
    return %arg0, %c0_i32 : i32, i32
  }
}

</mosaic_0001>

<llo_original>
// kernel: vit_dat_forward.2
$region0: #{vit_dat_forward.2}
  #allocation0 [shape = 'u32[]', space=smem, size = 0x4, offset = 0x4, fixed_abs, tag = 'smem constant byte address 0x4 - core index']
  #allocation1 [shape = 'u32[72,128]{1,0:T(1,128)}', space=vmem, size = 0x9000, scoped, tag = 'internal scratch']
  %s0 = inlined_call_operand.vmem [shape: bf16[8,192], index: 0, kind: input, shape index: {}]
  %s1 = inlined_call_operand.vmem [shape: bf16[192,32], index: 1, kind: input, shape index: {}]
  %s2 = inlined_call_operand.vmem [shape: f32[1,32], index: 2, kind: input, shape index: {}]
  %s3 = inlined_call_operand.vmem [shape: f32[8,32], index: 3, kind: output, shape index: {}]
  %s4 = sld [smem:[#allocation0]]
  $region22: #{vit_dat_forward.2} parent=0
    _
  %s6 = ssub.s32 1, %s4
  %s7 = scalar_select 0, %s6, %s4
  // Predicated region
  $region2: #{vit_dat_forward.2} parent=0 // pred_check
    _
  $region3: #{vit_dat_forward.2} parent=0 // pred_check_branch
    %9 = sbr.rel (0) target = $region5
  $region4: #{vit_dat_forward.2} parent=0 // pred_region
    _
  $region5: #{vit_dat_forward.2} parent=0 // pred_fallthru
    _
  // Predicated region
  $region6: #{vit_dat_forward.2} parent=0 // pred_check
    _
  $region7: #{vit_dat_forward.2} parent=0 // pred_check_branch
    %11 = sbr.rel (0) target = $region9
  $region8: #{vit_dat_forward.2} parent=0 // pred_region
    _
  $region9: #{vit_dat_forward.2} parent=0 // pred_fallthru
    _
  // Predicated region
  $region10: #{vit_dat_forward.2} parent=0 // pred_check
    _
  $region11: #{vit_dat_forward.2} parent=0 // pred_check_branch
    %13 = sbr.rel (0) target = $region13
  $region12: #{vit_dat_forward.2} parent=0 // pred_region
    _
  $region13: #{vit_dat_forward.2} parent=0 // pred_fallthru
    _
  %v15 = vld [vmem:[%s0] sm:$0xff]
  %v16 = vld [vmem:[%s1] sm:$0xf]
  %v17 = vld [vmem:[%s1 + $0x4] sm:$0xf]
  %v18 = vld [vmem:[%s1 + $0x8] sm:$0xf]
  %v19 = vld [vmem:[%s1 + $0xc] sm:$0xf]
  %v20 = vld [vmem:[%s1 + $0x10] sm:$0xf]
  %v21 = vld [vmem:[%s1 + $0x14] sm:$0xf]
  %v22 = vld [vmem:[%s1 + $0x18] sm:$0xf]
  %v23 = vld [vmem:[%s1 + $0x1c] sm:$0xf]
  %v24 = vld [vmem:[%s1 + $0x20] sm:$0xf]
  %v25 = vld [vmem:[%s1 + $0x24] sm:$0xf]
  %v26 = vld [vmem:[%s1 + $0x28] sm:$0xf]
  %v27 = vld [vmem:[%s1 + $0x2c] sm:$0xf]
  %v28 = vld [vmem:[%s1 + $0x30] sm:$0xf]
  %v29 = vld [vmem:[%s1 + $0x34] sm:$0xf]
  %v30 = vld [vmem:[%s1 + $0x38] sm:$0xf]
  %v31 = vld [vmem:[%s1 + $0x3c] sm:$0xf]
  %v32 = vld [vmem:[%s1 + $0x40] sm:$0xf]
  %v33 = vld [vmem:[%s1 + $0x44] sm:$0xf]
  %v34 = vld [vmem:[%s1 + $0x48] sm:$0xf]
  %v35 = vld [vmem:[%s1 + $0x4c] sm:$0xf]
  %v36 = vld [vmem:[%s1 + $0x50] sm:$0xf]
  %v37 = vld [vmem:[%s1 + $0x54] sm:$0xf]
  %v38 = vld [vmem:[%s1 + $0x58] sm:$0xf]
  %v39 = vld [vmem:[%s1 + $0x5c] sm:$0xf]
  %v40 = vld [vmem:[%s2] sm:$0x1]
  %v42 = vperm.slane %v40, 0
  %v45 = vunpack.c.l.b16 %v15
  %v46 = vunpack.c.h.b16 %v15
  %v47 = vpack.c.b16 %v45, %v45
  %v48 = vpack.c.b16 %v46, %v46
  %v74 = vunpack.c.l.b16 %v16
  %v75 = vunpack.c.l.b16 %v17
  %v76 = vunpack.c.l.b16 %v18
  %v77 = vunpack.c.l.b16 %v19
  %v78 = vunpack.c.l.b16 %v20
  %v79 = vunpack.c.l.b16 %v21
  %v80 = vunpack.c.l.b16 %v22
  %v81 = vunpack.c.l.b16 %v23
  %v82 = vunpack.c.l.b16 %v24
  %v83 = vunpack.c.l.b16 %v25
  %v84 = vunpack.c.l.b16 %v26
  %v85 = vunpack.c.l.b16 %v27
  %v86 = vunpack.c.l.b16 %v28
  %v87 = vunpack.c.l.b16 %v29
  %v88 = vunpack.c.l.b16 %v30
  %v89 = vunpack.c.l.b16 %v31
  %v90 = vunpack.c.l.b16 %v32
  %v91 = vunpack.c.l.b16 %v33
  %v92 = vunpack.c.l.b16 %v34
  %v93 = vunpack.c.l.b16 %v35
  %v94 = vunpack.c.l.b16 %v36
  %v95 = vunpack.c.l.b16 %v37
  %v96 = vunpack.c.l.b16 %v38
  %v97 = vunpack.c.l.b16 %v39
  %v98 = vpack.c.b16 %v75, %v74
  %v99 = vpack.c.b16 %v77, %v76
  %v100 = vpack.c.b16 %v79, %v78
  %v101 = vpack.c.b16 %v81, %v80
  %v102 = vpack.c.b16 %v83, %v82
  %v103 = vpack.c.b16 %v85, %v84
  %v104 = vpack.c.b16 %v87, %v86
  %v105 = vpack.c.b16 %v89, %v88
  %v106 = vpack.c.b16 %v91, %v90
  %v107 = vpack.c.b16 %v93, %v92
  %v108 = vpack.c.b16 %v95, %v94
  %v109 = vpack.c.b16 %v97, %v96
  %vm122 = vcmask 523264
  %v124 = vsel %vm122, %v48, 0
  %126 = vmatpush.bf16.msra.mxu0 %v105
  %127 = vmatpush.bf16.msra.mxu0 %v104
  %128 = vmatpush.bf16.msra.mxu0 %v103
  %129 = vmatpush.bf16.msra.mxu0 %v102
  %130 = vmatpush.bf16.msra.mxu0 %v101
  %131 = vmatpush.bf16.msra.mxu0 %v100
  %132 = vmatpush.bf16.msra.mxu0 %v99
  %133 = vmatpush.bf16.msra.mxu0 %v98
  %134 = vmatmul.bf16.gmra.mxu0 %v47
  %v135 = vpop.f32.mrf.mxu0
  %v136 = vadd.f32 %v42, %v135
  %v137 = vpop.f32.mrf.mxu0
  %138 = vdwg.mxu0
  %139 = vmatpush.bf16.msra.mxu0 0
  %140 = vmatpush.bf16.msra.mxu0 0
  %141 = vmatpush.bf16.msra.mxu0 0
  %142 = vmatpush.bf16.msra.mxu0 0
  %143 = vmatpush.bf16.msra.mxu0 %v109
  %144 = vmatpush.bf16.msra.mxu0 %v108
  %145 = vmatpush.bf16.msra.mxu0 %v107
  %146 = vmatpush.bf16.msra.mxu0 %v106
  %147 = vmatmul.bf16.gmra.mxu0 %v124
  %v148 = vpop.f32.mrf.mxu0
  %v149 = vadd.f32 %v136, %v148
  %v150 = vpop.f32.mrf.mxu0
  %151 = vdwg.mxu0
  %vm152 = vcmask 261120
  %153 = vst.msk [vmem:[%s3] sm:$0xff] %vm152, %v149
  // Predicated region
  $region14: #{vit_dat_forward.2} parent=0 // pred_check
    _
  $region15: #{vit_dat_forward.2} parent=0 // pred_check_branch
    %155 = sbr.rel (0) target = $region17
  $region16: #{vit_dat_forward.2} parent=0 // pred_region
    _
  $region17: #{vit_dat_forward.2} parent=0 // pred_fallthru
    _
  // Predicated region
  $region18: #{vit_dat_forward.2} parent=0 // pred_check
    _
  $region19: #{vit_dat_forward.2} parent=0 // pred_check_branch
    %157 = sbr.rel (0) target = $region21
  $region20: #{vit_dat_forward.2} parent=0 // pred_region
    _
  $region21: #{vit_dat_forward.2} parent=0 // pred_fallthru
    _

// kernel: vit_dat_forward.3
$region0: #{vit_dat_forward.3}
  #allocation0 [shape = 'u32[]', space=smem, size = 0x4, offset = 0x4, fixed_abs, tag = 'smem constant byte address 0x4 - core index']
  #allocation1 [shape = 'u32[72,128]{1,0:T(1,128)}', space=vmem, size = 0x9000, scoped, tag = 'internal scratch']
  #allocation2 [shape = 'f32[16,32]{1,0:T(8,128)}', space=vmem, size = 0x2000, scoped, tag = 'scratch operand']
  #allocation3 [shape = 'bf16[16,96]{1,0:T(8,128)(2,1)}', space=vmem, size = 0x1000, scoped, tag = 'scratch operand']
  #allocation4 [shape = 'bf16[16,32]{1,0:T(8,128)(2,1)}', space=vmem, size = 0x1000, scoped, tag = 'scratch operand']
  %s0 = inlined_call_operand.vmem [shape: f32[32,32], index: 0, kind: input, shape index: {}]
  %s1 = inlined_call_operand.vmem [shape: f32[1,32], index: 1, kind: input, shape index: {}]
  %s2 = inlined_call_operand.vmem [shape: f32[1,32], index: 2, kind: input, shape index: {}]
  %s3 = inlined_call_operand.vmem [shape: f32[12,1,32], index: 3, kind: input, shape index: {}]
  %s4 = inlined_call_operand.vmem [shape: f32[12,1,32], index: 4, kind: input, shape index: {}]
  %s5 = inlined_call_operand.vmem [shape: bf16[12,32,96], index: 5, kind: input, shape index: {}]
  %s6 = inlined_call_operand.vmem [shape: f32[12,1,96], index: 6, kind: input, shape index: {}]
  %s7 = inlined_call_operand.vmem [shape: bf16[12,32,32], index: 7, kind: input, shape index: {}]
  %s8 = inlined_call_operand.vmem [shape: f32[12,1,32], index: 8, kind: input, shape index: {}]
  %s9 = inlined_call_operand.vmem [shape: f32[12,1,32], index: 9, kind: input, shape index: {}]
  %s10 = inlined_call_operand.vmem [shape: f32[12,1,32], index: 10, kind: input, shape index: {}]
  %s11 = inlined_call_operand.vmem [shape: bf16[12,128,32], index: 11, kind: input, shape index: {}]
  %s12 = inlined_call_operand.vmem [shape: f32[12,1,128], index: 12, kind: input, shape index: {}]
  %s13 = inlined_call_operand.vmem [shape: bf16[12,128,32], index: 13, kind: input, shape index: {}]
  %s14 = inlined_call_operand.vmem [shape: f32[12,1,32], index: 14, kind: input, shape index: {}]
  %s15 = inlined_call_operand.vmem [shape: f32[1,32], index: 15, kind: input, shape index: {}]
  %s16 = inlined_call_operand.vmem [shape: f32[1,32], index: 16, kind: input, shape index: {}]
  %s17 = inlined_call_operand.vmem [shape: bf16[32,16], index: 17, kind: input, shape index: {}]
  %s18 = inlined_call_operand.vmem [shape: f32[32,32], index: 18, kind: output, shape index: {0}]
  %s19 = inlined_call_operand.vmem [shape: f32[32,32], index: 19, kind: output, shape index: {1}]
  %s20 = inlined_call_operand.vmem [shape: f32[32,16], index: 20, kind: output, shape index: {2}]
  %21 = xla_tuple %s18, %s19, %s20
  %s22 = sld [smem:[#allocation0]]
  $region133: #{vit_dat_forward.3} parent=0
    _
  %s24 = ssub.s32 1, %s22
  %s25 = scalar_select 0, %s24, %s22
  loop: start=0, step=1, limit=26
  $region2: #{vit_dat_forward.3} parent=0 // loop_pre_header
    _
  $region3: #{vit_dat_forward.3} parent=0 // loop_header
    %s27 = sphi 0, %s31
    %p28 = scmp.ge.s32.totalorder %s27, 26
    %s34 = sphi 0, %s46
    %s35 = sphi 0, %s42
    %s36 = sphi 0, %s34
    %s37 = sphi 0, %s35
    %s38 = sphi 0, %s36
    %s39 = sphi 0, %s37
    %s49 = sphi 0, %s51
    %s52 = sphi 0, %s49
    %s53 = sphi 0, %s52
    %s69 = sphi 0, %s53
    %s73 = sphi 0, %s73
    %s75 = sphi 0, %s73
    %s76 = sphi 0, %s75
    %s90 = sphi 0, %s76
    %s94 = sphi 0, %s94
    %s96 = sphi 0, %s94
    %s97 = sphi 0, %s96
    %s111 = sphi 0, %s97
    %s117 = sphi 0, %s119
    %s120 = sphi 0, %s117
    %s121 = sphi 0, %s120
    %s137 = sphi 0, %s121
    %s143 = sphi 0, %s145
    %s146 = sphi 0, %s143
    %s147 = sphi 0, %s146
    %s163 = sphi 0, %s147
    %s169 = sphi 0, %s171
    %s172 = sphi 0, %s169
    %s173 = sphi 0, %s172
    %s189 = sphi 0, %s173
    %s195 = sphi 0, %s197
    %s198 = sphi 0, %s195
    %s199 = sphi 0, %s198
    %s215 = sphi 0, %s199
    %s221 = sphi 0, %s223
    %s224 = sphi 0, %s221
    %s225 = sphi 0, %s224
    %s241 = sphi 0, %s225
    %s247 = sphi 0, %s249
    %s250 = sphi 0, %s247
    %s251 = sphi 0, %s250
    %s267 = sphi 0, %s251
    %s273 = sphi 0, %s275
    %s276 = sphi 0, %s273
    %s277 = sphi 0, %s276
    %s293 = sphi 0, %s277
    %s299 = sphi 0, %s301
    %s302 = sphi 0, %s299
    %s303 = sphi 0, %s302
    %s319 = sphi 0, %s303
    %s325 = sphi 0, %s327
    %s328 = sphi 0, %s325
    %s329 = sphi 0, %s328
    %s345 = sphi 0, %s329
    %s351 = sphi 0, %s353
    %s354 = sphi 0, %s351
    %s355 = sphi 0, %s354
    %s371 = sphi 0, %s355
    %s377 = sphi 0, %s379
    %s380 = sphi 0, %s377
    %s381 = sphi 0, %s380
    %s397 = sphi 0, %s381
    %s403 = sphi 0, %s405
    %s406 = sphi 0, %s403
    %s407 = sphi 0, %s406
    %s423 = sphi 0, %s407
    %s427 = sphi 0, %s427
    %s429 = sphi 0, %s427
    %s430 = sphi 0, %s429
    %s444 = sphi 0, %s430
    %s448 = sphi 0, %s448
    %s450 = sphi 0, %s448
    %s451 = sphi 0, %s450
    %s465 = sphi 0, %s451
    %s469 = sphi 0, %s469
    %s471 = sphi 0, %s469
    %s472 = sphi 0, %s471
    %s486 = sphi 0, %s472
    %s492 = sphi 0, %s494
    %s495 = sphi 0, %s492
    %s496 = sphi 0, %s495
    %s512 = sphi 0, %s496
    %s518 = sphi 0, %s520
    %s521 = sphi 0, %s518
    %s522 = sphi 0, %s521
    %s538 = sphi 0, %s522
    %s544 = sphi 0, %s546
    %s547 = sphi 0, %s544
    %s548 = sphi 0, %s547
    %s564 = sphi 0, %s548
  $region4: #{vit_dat_forward.3} parent=0 // loop_header_branch
    %30 = sbr.rel (%p28) target = $region8
  $region5: #{vit_dat_forward.3} parent=0 // loop_body
    %s32 = ssub.s32 %s27, 1
    %s33 = ssub.s32 %s27, 2
    %s40 = sadd.s32 1, %s35
    %p41 = scmp.ge.s32.totalorder %s40, 12
    %s42 = scalar_select %p41, 0, %s40
    %s43 = sadd.s32 1, %s34
    %s44 = scalar_select %p41, %s43, %s34
    %p45 = scmp.ge.s32.totalorder %s44, 2
    %s46 = scalar_select %p45, 0, %s44
    %s47 = ssub.s32 %s34, %s46
    %p48 = scmp.eq.s32.totalorder %s47, 0
    %s50 = sadd.s32 %s49, 1
    %s51 = scalar_select %p48, %s49, %s50
    %p54 = pneg %p48
    %p55 = scmp.eq.s32.totalorder %s27, 23
    %p56 = por %p54, %p55
    %p57 = scmp.ne.s32.totalorder %s49, %s52
    %p58 = scmp.eq.s32.totalorder %s27, 0
    %p59 = por %p57, %p58
    %p60 = scmp.ne.s32.totalorder %s49, %s52
    %p61 = scmp.eq.s32.totalorder %s32, 23
    %p62 = por %p60, %p61
    %p63 = scmp.ne.s32.totalorder %s52, %s53
    %p64 = scmp.eq.s32.totalorder %s32, 0
    %p65 = por %p63, %p64
    %p66 = scmp.ne.s32.totalorder %s52, %s53
    %p67 = scmp.eq.s32.totalorder %s33, 23
    %p68 = por %p66, %p67
    %p70 = scmp.ne.s32.totalorder %s53, %s69
    %p71 = scmp.eq.s32.totalorder %s33, 0
    %p72 = por %p70, %p71
    %s74 = sadd.s32 %s73, 1
    %p77 = scmp.eq.s32.totalorder %s27, 23
    %p78 = scmp.ne.s32.totalorder %s73, %s75
    %p79 = scmp.eq.s32.totalorder %s27, 0
    %p80 = por %p78, %p79
    %p81 = scmp.ne.s32.totalorder %s73, %s75
    %p82 = scmp.eq.s32.totalorder %s32, 23
    %p83 = por %p81, %p82
    %p84 = scmp.ne.s32.totalorder %s75, %s76
    %p85 = scmp.eq.s32.totalorder %s32, 0
    %p86 = por %p84, %p85
    %p87 = scmp.ne.s32.totalorder %s75, %s76
    %p88 = scmp.eq.s32.totalorder %s33, 23
    %p89 = por %p87, %p88
    %p91 = scmp.ne.s32.totalorder %s76, %s90
    %p92 = scmp.eq.s32.totalorder %s33, 0
    %p93 = por %p91, %p92
    %s95 = sadd.s32 %s94, 1
    %p98 = scmp.eq.s32.totalorder %s27, 23
    %p99 = scmp.ne.s32.totalorder %s94, %s96
    %p100 = scmp.eq.s32.totalorder %s27, 0
    %p101 = por %p99, %p100
    %p102 = scmp.ne.s32.totalorder %s94, %s96
    %p103 = scmp.eq.s32.totalorder %s32, 23
    %p104 = por %p102, %p103
    %p105 = scmp.ne.s32.totalorder %s96, %s97
    %p106 = scmp.eq.s32.totalorder %s32, 0
    %p107 = por %p105, %p106
    %p108 = scmp.ne.s32.totalorder %s96, %s97
    %p109 = scmp.eq.s32.totalorder %s33, 23
    %p110 = por %p108, %p109
    %p112 = scmp.ne.s32.totalorder %s97, %s111
    %p113 = scmp.eq.s32.totalorder %s33, 0
    %p114 = por %p112, %p113
    %s115 = ssub.s32 %s35, %s42
    %p116 = scmp.eq.s32.totalorder %s115, 0
    %s118 = sadd.s32 %s117, 1
    %s119 = scalar_select %p116, %s117, %s118
    %p122 = pneg %p116
    %p123 = scmp.eq.s32.totalorder %s27, 23
    %p124 = por %p122, %p123
    %p125 = scmp.ne.s32.totalorder %s117, %s120
    %p126 = scmp.eq.s32.totalorder %s27, 0
    %p127 = por %p125, %p126
    %p128 = scmp.ne.s32.totalorder %s117, %s120
    %p129 = scmp.eq.s32.totalorder %s32, 23
    %p130 = por %p128, %p129
    %p131 = scmp.ne.s32.totalorder %s120, %s121
    %p132 = scmp.eq.s32.totalorder %s32, 0
    %p133 = por %p131, %p132
    %p134 = scmp.ne.s32.totalorder %s120, %s121
    %p135 = scmp.eq.s32.totalorder %s33, 23
    %p136 = por %p134, %p135
    %p138 = scmp.ne.s32.totalorder %s121, %s137
    %p139 = scmp.eq.s32.totalorder %s33, 0
    %p140 = por %p138, %p139
    %s141 = ssub.s32 %s35, %s42
    %p142 = scmp.eq.s32.totalorder %s141, 0
    %s144 = sadd.s32 %s143, 1
    %s145 = scalar_select %p142, %s143, %s144
    %p148 = pneg %p142
    %p149 = scmp.eq.s32.totalorder %s27, 23
    %p150 = por %p148, %p149
    %p151 = scmp.ne.s32.totalorder %s143, %s146
    %p152 = scmp.eq.s32.totalorder %s27, 0
    %p153 = por %p151, %p152
    %p154 = scmp.ne.s32.totalorder %s143, %s146
    %p155 = scmp.eq.s32.totalorder %s32, 23
    %p156 = por %p154, %p155
    %p157 = scmp.ne.s32.totalorder %s146, %s147
    %p158 = scmp.eq.s32.totalorder %s32, 0
    %p159 = por %p157, %p158
    %p160 = scmp.ne.s32.totalorder %s146, %s147
    %p161 = scmp.eq.s32.totalorder %s33, 23
    %p162 = por %p160, %p161
    %p164 = scmp.ne.s32.totalorder %s147, %s163
    %p165 = scmp.eq.s32.totalorder %s33, 0
    %p166 = por %p164, %p165
    %s167 = ssub.s32 %s35, %s42
    %p168 = scmp.eq.s32.totalorder %s167, 0
    %s170 = sadd.s32 %s169, 1
    %s171 = scalar_select %p168, %s169, %s170
    %p174 = pneg %p168
    %p175 = scmp.eq.s32.totalorder %s27, 23
    %p176 = por %p174, %p175
    %p177 = scmp.ne.s32.totalorder %s169, %s172
    %p178 = scmp.eq.s32.totalorder %s27, 0
    %p179 = por %p177, %p178
    %p180 = scmp.ne.s32.totalorder %s169, %s172
    %p181 = scmp.eq.s32.totalorder %s32, 23
    %p182 = por %p180, %p181
    %p183 = scmp.ne.s32.totalorder %s172, %s173
    %p184 = scmp.eq.s32.totalorder %s32, 0
    %p185 = por %p183, %p184
    %p186 = scmp.ne.s32.totalorder %s172, %s173
    %p187 = scmp.eq.s32.totalorder %s33, 23
    %p188 = por %p186, %p187
    %p190 = scmp.ne.s32.totalorder %s173, %s189
    %p191 = scmp.eq.s32.totalorder %s33, 0
    %p192 = por %p190, %p191
    %s193 = ssub.s32 %s35, %s42
    %p194 = scmp.eq.s32.totalorder %s193, 0
    %s196 = sadd.s32 %s195, 1
    %s197 = scalar_select %p194, %s195, %s196
    %p200 = pneg %p194
    %p201 = scmp.eq.s32.totalorder %s27, 23
    %p202 = por %p200, %p201
    %p203 = scmp.ne.s32.totalorder %s195, %s198
    %p204 = scmp.eq.s32.totalorder %s27, 0
    %p205 = por %p203, %p204
    %p206 = scmp.ne.s32.totalorder %s195, %s198
    %p207 = scmp.eq.s32.totalorder %s32, 23
    %p208 = por %p206, %p207
    %p209 = scmp.ne.s32.totalorder %s198, %s199
    %p210 = scmp.eq.s32.totalorder %s32, 0
    %p211 = por %p209, %p210
    %p212 = scmp.ne.s32.totalorder %s198, %s199
    %p213 = scmp.eq.s32.totalorder %s33, 23
    %p214 = por %p212, %p213
    %p216 = scmp.ne.s32.totalorder %s199, %s215
    %p217 = scmp.eq.s32.totalorder %s33, 0
    %p218 = por %p216, %p217
    %s219 = ssub.s32 %s35, %s42
    %p220 = scmp.eq.s32.totalorder %s219, 0
    %s222 = sadd.s32 %s221, 1
    %s223 = scalar_select %p220, %s221, %s222
    %p226 = pneg %p220
    %p227 = scmp.eq.s32.totalorder %s27, 23
    %p228 = por %p226, %p227
    %p229 = scmp.ne.s32.totalorder %s221, %s224
    %p230 = scmp.eq.s32.totalorder %s27, 0
    %p231 = por %p229, %p230
    %p232 = scmp.ne.s32.totalorder %s221, %s224
    %p233 = scmp.eq.s32.totalorder %s32, 23
    %p234 = por %p232, %p233
    %p235 = scmp.ne.s32.totalorder %s224, %s225
    %p236 = scmp.eq.s32.totalorder %s32, 0
    %p237 = por %p235, %p236
    %p238 = scmp.ne.s32.totalorder %s224, %s225
    %p239 = scmp.eq.s32.totalorder %s33, 23
    %p240 = por %p238, %p239
    %p242 = scmp.ne.s32.totalorder %s225, %s241
    %p243 = scmp.eq.s32.totalorder %s33, 0
    %p244 = por %p242, %p243
    %s245 = ssub.s32 %s35, %s42
    %p246 = scmp.eq.s32.totalorder %s245, 0
    %s248 = sadd.s32 %s247, 1
    %s249 = scalar_select %p246, %s247, %s248
    %p252 = pneg %p246
    %p253 = scmp.eq.s32.totalorder %s27, 23
    %p254 = por %p252, %p253
    %p255 = scmp.ne.s32.totalorder %s247, %s250
    %p256 = scmp.eq.s32.totalorder %s27, 0
    %p257 = por %p255, %p256
    %p258 = scmp.ne.s32.totalorder %s247, %s250
    %p259 = scmp.eq.s32.totalorder %s32, 23
    %p260 = por %p258, %p259
    %p261 = scmp.ne.s32.totalorder %s250, %s251
    %p262 = scmp.eq.s32.totalorder %s32, 0
    %p263 = por %p261, %p262
    %p264 = scmp.ne.s32.totalorder %s250, %s251
    %p265 = scmp.eq.s32.totalorder %s33, 23
    %p266 = por %p264, %p265
    %p268 = scmp.ne.s32.totalorder %s251, %s267
    %p269 = scmp.eq.s32.totalorder %s33, 0
    %p270 = por %p268, %p269
    %s271 = ssub.s32 %s35, %s42
    %p272 = scmp.eq.s32.totalorder %s271, 0
    %s274 = sadd.s32 %s273, 1
    %s275 = scalar_select %p272, %s273, %s274
    %p278 = pneg %p272
    %p279 = scmp.eq.s32.totalorder %s27, 23
    %p280 = por %p278, %p279
    %p281 = scmp.ne.s32.totalorder %s273, %s276
    %p282 = scmp.eq.s32.totalorder %s27, 0
    %p283 = por %p281, %p282
    %p284 = scmp.ne.s32.totalorder %s273, %s276
    %p285 = scmp.eq.s32.totalorder %s32, 23
    %p286 = por %p284, %p285
    %p287 = scmp.ne.s32.totalorder %s276, %s277
    %p288 = scmp.eq.s32.totalorder %s32, 0
    %p289 = por %p287, %p288
    %p290 = scmp.ne.s32.totalorder %s276, %s277
    %p291 = scmp.eq.s32.totalorder %s33, 23
    %p292 = por %p290, %p291
    %p294 = scmp.ne.s32.totalorder %s277, %s293
    %p295 = scmp.eq.s32.totalorder %s33, 0
    %p296 = por %p294, %p295
    %s297 = ssub.s32 %s35, %s42
    %p298 = scmp.eq.s32.totalorder %s297, 0
    %s300 = sadd.s32 %s299, 1
    %s301 = scalar_select %p298, %s299, %s300
    %p304 = pneg %p298
    %p305 = scmp.eq.s32.totalorder %s27, 23
    %p306 = por %p304, %p305
    %p307 = scmp.ne.s32.totalorder %s299, %s302
    %p308 = scmp.eq.s32.totalorder %s27, 0
    %p309 = por %p307, %p308
    %p310 = scmp.ne.s32.totalorder %s299, %s302
    %p311 = scmp.eq.s32.totalorder %s32, 23
    %p312 = por %p310, %p311
    %p313 = scmp.ne.s32.totalorder %s302, %s303
    %p314 = scmp.eq.s32.totalorder %s32, 0
    %p315 = por %p313, %p314
    %p316 = scmp.ne.s32.totalorder %s302, %s303
    %p317 = scmp.eq.s32.totalorder %s33, 23
    %p318 = por %p316, %p317
    %p320 = scmp.ne.s32.totalorder %s303, %s319
    %p321 = scmp.eq.s32.totalorder %s33, 0
    %p322 = por %p320, %p321
    %s323 = ssub.s32 %s35, %s42
    %p324 = scmp.eq.s32.totalorder %s323, 0
    %s326 = sadd.s32 %s325, 1
    %s327 = scalar_select %p324, %s325, %s326
    %p330 = pneg %p324
    %p331 = scmp.eq.s32.totalorder %s27, 23
    %p332 = por %p330, %p331
    %p333 = scmp.ne.s32.totalorder %s325, %s328
    %p334 = scmp.eq.s32.totalorder %s27, 0
    %p335 = por %p333, %p334
    %p336 = scmp.ne.s32.totalorder %s325, %s328
    %p337 = scmp.eq.s32.totalorder %s32, 23
    %p338 = por %p336, %p337
    %p339 = scmp.ne.s32.totalorder %s328, %s329
    %p340 = scmp.eq.s32.totalorder %s32, 0
    %p341 = por %p339, %p340
    %p342 = scmp.ne.s32.totalorder %s328, %s329
    %p343 = scmp.eq.s32.totalorder %s33, 23
    %p344 = por %p342, %p343
    %p346 = scmp.ne.s32.totalorder %s329, %s345
    %p347 = scmp.eq.s32.totalorder %s33, 0
    %p348 = por %p346, %p347
    %s349 = ssub.s32 %s35, %s42
    %p350 = scmp.eq.s32.totalorder %s349, 0
    %s352 = sadd.s32 %s351, 1
    %s353 = scalar_select %p350, %s351, %s352
    %p356 = pneg %p350
    %p357 = scmp.eq.s32.totalorder %s27, 23
    %p358 = por %p356, %p357
    %p359 = scmp.ne.s32.totalorder %s351, %s354
    %p360 = scmp.eq.s32.totalorder %s27, 0
    %p361 = por %p359, %p360
    %p362 = scmp.ne.s32.totalorder %s351, %s354
    %p363 = scmp.eq.s32.totalorder %s32, 23
    %p364 = por %p362, %p363
    %p365 = scmp.ne.s32.totalorder %s354, %s355
    %p366 = scmp.eq.s32.totalorder %s32, 0
    %p367 = por %p365, %p366
    %p368 = scmp.ne.s32.totalorder %s354, %s355
    %p369 = scmp.eq.s32.totalorder %s33, 23
    %p370 = por %p368, %p369
    %p372 = scmp.ne.s32.totalorder %s355, %s371
    %p373 = scmp.eq.s32.totalorder %s33, 0
    %p374 = por %p372, %p373
    %s375 = ssub.s32 %s35, %s42
    %p376 = scmp.eq.s32.totalorder %s375, 0
    %s378 = sadd.s32 %s377, 1
    %s379 = scalar_select %p376, %s377, %s378
    %p382 = pneg %p376
    %p383 = scmp.eq.s32.totalorder %s27, 23
    %p384 = por %p382, %p383
    %p385 = scmp.ne.s32.totalorder %s377, %s380
    %p386 = scmp.eq.s32.totalorder %s27, 0
    %p387 = por %p385, %p386
    %p388 = scmp.ne.s32.totalorder %s377, %s380
    %p389 = scmp.eq.s32.totalorder %s32, 23
    %p390 = por %p388, %p389
    %p391 = scmp.ne.s32.totalorder %s380, %s381
    %p392 = scmp.eq.s32.totalorder %s32, 0
    %p393 = por %p391, %p392
    %p394 = scmp.ne.s32.totalorder %s380, %s381
    %p395 = scmp.eq.s32.totalorder %s33, 23
    %p396 = por %p394, %p395
    %p398 = scmp.ne.s32.totalorder %s381, %s397
    %p399 = scmp.eq.s32.totalorder %s33, 0
    %p400 = por %p398, %p399
    %s401 = ssub.s32 %s35, %s42
    %p402 = scmp.eq.s32.totalorder %s401, 0
    %s404 = sadd.s32 %s403, 1
    %s405 = scalar_select %p402, %s403, %s404
    %p408 = pneg %p402
    %p409 = scmp.eq.s32.totalorder %s27, 23
    %p410 = por %p408, %p409
    %p411 = scmp.ne.s32.totalorder %s403, %s406
    %p412 = scmp.eq.s32.totalorder %s27, 0
    %p413 = por %p411, %p412
    %p414 = scmp.ne.s32.totalorder %s403, %s406
    %p415 = scmp.eq.s32.totalorder %s32, 23
    %p416 = por %p414, %p415
    %p417 = scmp.ne.s32.totalorder %s406, %s407
    %p418 = scmp.eq.s32.totalorder %s32, 0
    %p419 = por %p417, %p418
    %p420 = scmp.ne.s32.totalorder %s406, %s407
    %p421 = scmp.eq.s32.totalorder %s33, 23
    %p422 = por %p420, %p421
    %p424 = scmp.ne.s32.totalorder %s407, %s423
    %p425 = scmp.eq.s32.totalorder %s33, 0
    %p426 = por %p424, %p425
    %s428 = sadd.s32 %s427, 1
    %p431 = scmp.eq.s32.totalorder %s27, 23
    %p432 = scmp.ne.s32.totalorder %s427, %s429
    %p433 = scmp.eq.s32.totalorder %s27, 0
    %p434 = por %p432, %p433
    %p435 = scmp.ne.s32.totalorder %s427, %s429
    %p436 = scmp.eq.s32.totalorder %s32, 23
    %p437 = por %p435, %p436
    %p438 = scmp.ne.s32.totalorder %s429, %s430
    %p439 = scmp.eq.s32.totalorder %s32, 0
    %p440 = por %p438, %p439
    %p441 = scmp.ne.s32.totalorder %s429, %s430
    %p442 = scmp.eq.s32.totalorder %s33, 23
    %p443 = por %p441, %p442
    %p445 = scmp.ne.s32.totalorder %s430, %s444
    %p446 = scmp.eq.s32.totalorder %s33, 0
    %p447 = por %p445, %p446
    %s449 = sadd.s32 %s448, 1
    %p452 = scmp.eq.s32.totalorder %s27, 23
    %p453 = scmp.ne.s32.totalorder %s448, %s450
    %p454 = scmp.eq.s32.totalorder %s27, 0
    %p455 = por %p453, %p454
    %p456 = scmp.ne.s32.totalorder %s448, %s450
    %p457 = scmp.eq.s32.totalorder %s32, 23
    %p458 = por %p456, %p457
    %p459 = scmp.ne.s32.totalorder %s450, %s451
    %p460 = scmp.eq.s32.totalorder %s32, 0
    %p461 = por %p459, %p460
    %p462 = scmp.ne.s32.totalorder %s450, %s451
    %p463 = scmp.eq.s32.totalorder %s33, 23
    %p464 = por %p462, %p463
    %p466 = scmp.ne.s32.totalorder %s451, %s465
    %p467 = scmp.eq.s32.totalorder %s33, 0
    %p468 = por %p466, %p467
    %s470 = sadd.s32 %s469, 1
    %p473 = scmp.eq.s32.totalorder %s27, 23
    %p474 = scmp.ne.s32.totalorder %s469, %s471
    %p475 = scmp.eq.s32.totalorder %s27, 0
    %p476 = por %p474, %p475
    %p477 = scmp.ne.s32.totalorder %s469, %s471
    %p478 = scmp.eq.s32.totalorder %s32, 23
    %p479 = por %p477, %p478
    %p480 = scmp.ne.s32.totalorder %s471, %s472
    %p481 = scmp.eq.s32.totalorder %s32, 0
    %p482 = por %p480, %p481
    %p483 = scmp.ne.s32.totalorder %s471, %s472
    %p484 = scmp.eq.s32.totalorder %s33, 23
    %p485 = por %p483, %p484
    %p487 = scmp.ne.s32.totalorder %s472, %s486
    %p488 = scmp.eq.s32.totalorder %s33, 0
    %p489 = por %p487, %p488
    %s490 = ssub.s32 %s34, %s46
    %p491 = scmp.eq.s32.totalorder %s490, 0
    %s493 = sadd.s32 %s492, 1
    %s494 = scalar_select %p491, %s492, %s493
    %p497 = pneg %p491
    %p498 = scmp.eq.s32.totalorder %s27, 23
    %p499 = por %p497, %p498
    %p500 = scmp.ne.s32.totalorder %s492, %s495
    %p501 = scmp.eq.s32.totalorder %s27, 0
    %p502 = por %p500, %p501
    %p503 = scmp.ne.s32.totalorder %s492, %s495
    %p504 = scmp.eq.s32.totalorder %s32, 23
    %p505 = por %p503, %p504
    %p506 = scmp.ne.s32.totalorder %s495, %s496
    %p507 = scmp.eq.s32.totalorder %s32, 0
    %p508 = por %p506, %p507
    %p509 = scmp.ne.s32.totalorder %s495, %s496
    %p510 = scmp.eq.s32.totalorder %s33, 23
    %p511 = por %p509, %p510
    %p513 = scmp.ne.s32.totalorder %s496, %s512
    %p514 = scmp.eq.s32.totalorder %s33, 0
    %p515 = por %p513, %p514
    %s516 = ssub.s32 %s34, %s46
    %p517 = scmp.eq.s32.totalorder %s516, 0
    %s519 = sadd.s32 %s518, 1
    %s520 = scalar_select %p517, %s518, %s519
    %p523 = pneg %p517
    %p524 = scmp.eq.s32.totalorder %s27, 23
    %p525 = por %p523, %p524
    %p526 = scmp.ne.s32.totalorder %s518, %s521
    %p527 = scmp.eq.s32.totalorder %s27, 0
    %p528 = por %p526, %p527
    %p529 = scmp.ne.s32.totalorder %s518, %s521
    %p530 = scmp.eq.s32.totalorder %s32, 23
    %p531 = por %p529, %p530
    %p532 = scmp.ne.s32.totalorder %s521, %s522
    %p533 = scmp.eq.s32.totalorder %s32, 0
    %p534 = por %p532, %p533
    %p535 = scmp.ne.s32.totalorder %s521, %s522
    %p536 = scmp.eq.s32.totalorder %s33, 23
    %p537 = por %p535, %p536
    %p539 = scmp.ne.s32.totalorder %s522, %s538
    %p540 = scmp.eq.s32.totalorder %s33, 0
    %p541 = por %p539, %p540
    %s542 = ssub.s32 %s34, %s46
    %p543 = scmp.eq.s32.totalorder %s542, 0
    %s545 = sadd.s32 %s544, 1
    %s546 = scalar_select %p543, %s544, %s545
    %p549 = pneg %p543
    %p550 = scmp.eq.s32.totalorder %s27, 23
    %p551 = por %p549, %p550
    %p552 = scmp.ne.s32.totalorder %s544, %s547
    %p553 = scmp.eq.s32.totalorder %s27, 0
    %p554 = por %p552, %p553
    %p555 = scmp.ne.s32.totalorder %s544, %s547
    %p556 = scmp.eq.s32.totalorder %s32, 23
    %p557 = por %p555, %p556
    %p558 = scmp.ne.s32.totalorder %s547, %s548
    %p559 = scmp.eq.s32.totalorder %s32, 0
    %p560 = por %p558, %p559
    %p561 = scmp.ne.s32.totalorder %s547, %s548
    %p562 = scmp.eq.s32.totalorder %s33, 23
    %p563 = por %p561, %p562
    %p565 = scmp.ne.s32.totalorder %s548, %s564
    %p566 = scmp.eq.s32.totalorder %s33, 0
    %p567 = por %p565, %p566
    %p568 = scmp.le.s32.totalorder 1, %s27
    %p569 = scmp.lt.s32.totalorder %s27, 25
    %p570 = pnand %p568, %p569
    %p571 = pneg %p570
    // Predicated region
    $region9: #{vit_dat_forward.3} parent=5 // pred_check
      _
    $region10: #{vit_dat_forward.3} parent=5 // pred_check_branch
      %573 = sbr.rel (%p570) target = $region12
    $region11: #{vit_dat_forward.3} parent=5 // pred_region
      %s574 = ssub.s32 %s27, 1
      // Predicated region
      $region13: #{vit_dat_forward.3} parent=11 // pred_check
        %p575 = pneg %p86
      $region14: #{vit_dat_forward.3} parent=11 // pred_check_branch
        %577 = sbr.rel (%p575) target = $region16
      $region15: #{vit_dat_forward.3} parent=11 // pred_region
        _
      $region16: #{vit_dat_forward.3} parent=11 // pred_fallthru
        _
      // Predicated region
      $region17: #{vit_dat_forward.3} parent=11 // pred_check
        %p578 = pneg %p107
      $region18: #{vit_dat_forward.3} parent=11 // pred_check_branch
        %580 = sbr.rel (%p578) target = $region20
      $region19: #{vit_dat_forward.3} parent=11 // pred_region
        _
      $region20: #{vit_dat_forward.3} parent=11 // pred_fallthru
        _
      // Predicated region
      $region21: #{vit_dat_forward.3} parent=11 // pred_check
        %p581 = pneg %p440
      $region22: #{vit_dat_forward.3} parent=11 // pred_check_branch
        %583 = sbr.rel (%p581) target = $region24
      $region23: #{vit_dat_forward.3} parent=11 // pred_region
        _
      $region24: #{vit_dat_forward.3} parent=11 // pred_fallthru
        _
      // Predicated region
      $region25: #{vit_dat_forward.3} parent=11 // pred_check
        %p584 = pneg %p461
      $region26: #{vit_dat_forward.3} parent=11 // pred_check_branch
        %586 = sbr.rel (%p584) target = $region28
      $region27: #{vit_dat_forward.3} parent=11 // pred_region
        _
      $region28: #{vit_dat_forward.3} parent=11 // pred_fallthru
        _
      // Predicated region
      $region29: #{vit_dat_forward.3} parent=11 // pred_check
        %p587 = pneg %p482
      $region30: #{vit_dat_forward.3} parent=11 // pred_check_branch
        %589 = sbr.rel (%p587) target = $region32
      $region31: #{vit_dat_forward.3} parent=11 // pred_region
        _
      $region32: #{vit_dat_forward.3} parent=11 // pred_fallthru
        _
    $region12: #{vit_dat_forward.3} parent=5 // pred_fallthru
      _
    %p590 = scmp.lt.s32.totalorder %s27, 24
    // Predicated region
    $region33: #{vit_dat_forward.3} parent=5 // pred_check
      %p591 = pneg %p590
    $region34: #{vit_dat_forward.3} parent=5 // pred_check_branch
      %593 = sbr.rel (%p591) target = $region36
    $region35: #{vit_dat_forward.3} parent=5 // pred_region
      // Predicated region
      $region37: #{vit_dat_forward.3} parent=35 // pred_check
        %p594 = pneg %p59
      $region38: #{vit_dat_forward.3} parent=35 // pred_check_branch
        %596 = sbr.rel (%p594) target = $region40
      $region39: #{vit_dat_forward.3} parent=35 // pred_region
        %s597 = smul.u32 2, %s34
        %p598 = scmp.lt.s32.totalorder %s597, 3
        %s599 = scalar_select %p598, %s597, 3
        %s600 = smul.addr %s599, 8
        %s601 = scalar_lea.vmem %s0, %s600
        %s602 = smul.u32 2, %s34
      $region40: #{vit_dat_forward.3} parent=35 // pred_fallthru
        _
      // Predicated region
      $region41: #{vit_dat_forward.3} parent=35 // pred_check
        %p603 = pneg %p127
      $region42: #{vit_dat_forward.3} parent=35 // pred_check_branch
        %605 = sbr.rel (%p603) target = $region44
      $region43: #{vit_dat_forward.3} parent=35 // pred_region
        %p606 = scmp.lt.s32.totalorder %s35, 11
        %s607 = scalar_select %p606, %s35, 11
        %s608 = scalar_lea.vmem %s3, %s607
      $region44: #{vit_dat_forward.3} parent=35 // pred_fallthru
        _
      // Predicated region
      $region45: #{vit_dat_forward.3} parent=35 // pred_check
        %p609 = pneg %p153
      $region46: #{vit_dat_forward.3} parent=35 // pred_check_branch
        %611 = sbr.rel (%p609) target = $region48
      $region47: #{vit_dat_forward.3} parent=35 // pred_region
        %p612 = scmp.lt.s32.totalorder %s35, 11
        %s613 = scalar_select %p612, %s35, 11
        %s614 = scalar_lea.vmem %s4, %s613
      $region48: #{vit_dat_forward.3} parent=35 // pred_fallthru
        _
      // Predicated region
      $region49: #{vit_dat_forward.3} parent=35 // pred_check
        %p615 = pneg %p179
      $region50: #{vit_dat_forward.3} parent=35 // pred_check_branch
        %617 = sbr.rel (%p615) target = $region52
      $region51: #{vit_dat_forward.3} parent=35 // pred_region
        %p618 = scmp.lt.s32.totalorder %s35, 11
        %s619 = scalar_select %p618, %s35, 11
        %s620 = smul.addr %s619, 4
        %s621 = smul.addr %s620, 4
        %s622 = scalar_lea.vmem %s5, %s621
      $region52: #{vit_dat_forward.3} parent=35 // pred_fallthru
        _
      // Predicated region
      $region53: #{vit_dat_forward.3} parent=35 // pred_check
        %p623 = pneg %p205
      $region54: #{vit_dat_forward.3} parent=35 // pred_check_branch
        %625 = sbr.rel (%p623) target = $region56
      $region55: #{vit_dat_forward.3} parent=35 // pred_region
        %p626 = scmp.lt.s32.totalorder %s35, 11
        %s627 = scalar_select %p626, %s35, 11
        %s628 = scalar_lea.vmem %s6, %s627
      $region56: #{vit_dat_forward.3} parent=35 // pred_fallthru
        _
      // Predicated region
      $region57: #{vit_dat_forward.3} parent=35 // pred_check
        %p629 = pneg %p231
      $region58: #{vit_dat_forward.3} parent=35 // pred_check_branch
        %631 = sbr.rel (%p629) target = $region60
      $region59: #{vit_dat_forward.3} parent=35 // pred_region
        %p632 = scmp.lt.s32.totalorder %s35, 11
        %s633 = scalar_select %p632, %s35, 11
        %s634 = smul.addr %s633, 4
        %s635 = smul.addr %s634, 4
        %s636 = scalar_lea.vmem %s7, %s635
      $region60: #{vit_dat_forward.3} parent=35 // pred_fallthru
        _
      // Predicated region
      $region61: #{vit_dat_forward.3} parent=35 // pred_check
        %p637 = pneg %p257
      $region62: #{vit_dat_forward.3} parent=35 // pred_check_branch
        %639 = sbr.rel (%p637) target = $region64
      $region63: #{vit_dat_forward.3} parent=35 // pred_region
        %p640 = scmp.lt.s32.totalorder %s35, 11
        %s641 = scalar_select %p640, %s35, 11
        %s642 = scalar_lea.vmem %s8, %s641
      $region64: #{vit_dat_forward.3} parent=35 // pred_fallthru
        _
      // Predicated region
      $region65: #{vit_dat_forward.3} parent=35 // pred_check
        %p643 = pneg %p283
      $region66: #{vit_dat_forward.3} parent=35 // pred_check_branch
        %645 = sbr.rel (%p643) target = $region68
      $region67: #{vit_dat_forward.3} parent=35 // pred_region
        %p646 = scmp.lt.s32.totalorder %s35, 11
        %s647 = scalar_select %p646, %s35, 11
        %s648 = scalar_lea.vmem %s9, %s647
      $region68: #{vit_dat_forward.3} parent=35 // pred_fallthru
        _
      // Predicated region
      $region69: #{vit_dat_forward.3} parent=35 // pred_check
        %p649 = pneg %p309
      $region70: #{vit_dat_forward.3} parent=35 // pred_check_branch
        %651 = sbr.rel (%p649) target = $region72
      $region71: #{vit_dat_forward.3} parent=35 // pred_region
        %p652 = scmp.lt.s32.totalorder %s35, 11
        %s653 = scalar_select %p652, %s35, 11
        %s654 = scalar_lea.vmem %s10, %s653
      $region72: #{vit_dat_forward.3} parent=35 // pred_fallthru
        _
      // Predicated region
      $region73: #{vit_dat_forward.3} parent=35 // pred_check
        %p655 = pneg %p335
      $region74: #{vit_dat_forward.3} parent=35 // pred_check_branch
        %657 = sbr.rel (%p655) target = $region76
      $region75: #{vit_dat_forward.3} parent=35 // pred_region
        %p658 = scmp.lt.s32.totalorder %s35, 11
        %s659 = scalar_select %p658, %s35, 11
        %s660 = smul.addr %s659, 16
        %s661 = smul.addr %s660, 4
        %s662 = scalar_lea.vmem %s11, %s661
      $region76: #{vit_dat_forward.3} parent=35 // pred_fallthru
        _
      // Predicated region
      $region77: #{vit_dat_forward.3} parent=35 // pred_check
        %p663 = pneg %p361
      $region78: #{vit_dat_forward.3} parent=35 // pred_check_branch
        %665 = sbr.rel (%p663) target = $region80
      $region79: #{vit_dat_forward.3} parent=35 // pred_region
        %p666 = scmp.lt.s32.totalorder %s35, 11
        %s667 = scalar_select %p666, %s35, 11
        %s668 = scalar_lea.vmem %s12, %s667
      $region80: #{vit_dat_forward.3} parent=35 // pred_fallthru
        _
      // Predicated region
      $region81: #{vit_dat_forward.3} parent=35 // pred_check
        %p669 = pneg %p387
      $region82: #{vit_dat_forward.3} parent=35 // pred_check_branch
        %671 = sbr.rel (%p669) target = $region84
      $region83: #{vit_dat_forward.3} parent=35 // pred_region
        %p672 = scmp.lt.s32.totalorder %s35, 11
        %s673 = scalar_select %p672, %s35, 11
        %s674 = smul.addr %s673, 16
        %s675 = smul.addr %s674, 4
        %s676 = scalar_lea.vmem %s13, %s675
      $region84: #{vit_dat_forward.3} parent=35 // pred_fallthru
        _
      // Predicated region
      $region85: #{vit_dat_forward.3} parent=35 // pred_check
        %p677 = pneg %p413
      $region86: #{vit_dat_forward.3} parent=35 // pred_check_branch
        %679 = sbr.rel (%p677) target = $region88
      $region87: #{vit_dat_forward.3} parent=35 // pred_region
        %p680 = scmp.lt.s32.totalorder %s35, 11
        %s681 = scalar_select %p680, %s35, 11
        %s682 = scalar_lea.vmem %s14, %s681
      $region88: #{vit_dat_forward.3} parent=35 // pred_fallthru
        _
    $region36: #{vit_dat_forward.3} parent=5 // pred_fallthru
      _
    %p683 = scmp.le.s32.totalorder 1, %s27
    %p684 = scmp.lt.s32.totalorder %s27, 25
    %p685 = pnand %p683, %p684
    %p686 = pneg %p685
    // Predicated region
    $region89: #{vit_dat_forward.3} parent=5 // pred_check
      _
    $region90: #{vit_dat_forward.3} parent=5 // pred_check_branch
      %688 = sbr.rel (%p685) target = $region92
    $region91: #{vit_dat_forward.3} parent=5 // pred_region
      %s689 = ssub.s32 %s27, 1
      %s690 = smul.u32 2, %s36
      %p691 = scmp.lt.s32.totalorder %s690, 3
      %s692 = scalar_select %p691, %s690, 3
      %s693 = smul.addr %s692, 8
      %s694 = scalar_lea.vmem %s0, %s693
      %p695 = pneg %p65
      %p696 = pneg %p62
      %p697 = pneg %p86
      %p698 = pneg %p83
      %p699 = pneg %p107
      %p700 = pneg %p104
      %p701 = scmp.lt.s32.totalorder %s37, 11
      %s702 = scalar_select %p701, %s37, 11
      %s703 = scalar_lea.vmem %s3, %s702
      %p704 = pneg %p133
      %p705 = pneg %p130
      %p706 = scmp.lt.s32.totalorder %s37, 11
      %s707 = scalar_select %p706, %s37, 11
      %s708 = scalar_lea.vmem %s4, %s707
      %p709 = pneg %p159
      %p710 = pneg %p156
      %p711 = scmp.lt.s32.totalorder %s37, 11
      %s712 = scalar_select %p711, %s37, 11
      %s713 = smul.addr %s712, 4
      %s714 = smul.addr %s713, 4
      %s715 = scalar_lea.vmem %s5, %s714
      %p716 = pneg %p185
      %p717 = pneg %p182
      %p718 = scmp.lt.s32.totalorder %s37, 11
      %s719 = scalar_select %p718, %s37, 11
      %s720 = scalar_lea.vmem %s6, %s719
      %p721 = pneg %p211
      %p722 = pneg %p208
      %p723 = scmp.lt.s32.totalorder %s37, 11
      %s724 = scalar_select %p723, %s37, 11
      %s725 = smul.addr %s724, 4
      %s726 = smul.addr %s725, 4
      %s727 = scalar_lea.vmem %s7, %s726
      %p728 = pneg %p237
      %p729 = pneg %p234
      %p730 = scmp.lt.s32.totalorder %s37, 11
      %s731 = scalar_select %p730, %s37, 11
      %s732 = scalar_lea.vmem %s8, %s731
      %p733 = pneg %p263
      %p734 = pneg %p260
      %p735 = scmp.lt.s32.totalorder %s37, 11
      %s736 = scalar_select %p735, %s37, 11
      %s737 = scalar_lea.vmem %s9, %s736
      %p738 = pneg %p289
      %p739 = pneg %p286
      %p740 = scmp.lt.s32.totalorder %s37, 11
      %s741 = scalar_select %p740, %s37, 11
      %s742 = scalar_lea.vmem %s10, %s741
      %p743 = pneg %p315
      %p744 = pneg %p312
      %p745 = scmp.lt.s32.totalorder %s37, 11
      %s746 = scalar_select %p745, %s37, 11
      %s747 = smul.addr %s746, 16
      %s748 = smul.addr %s747, 4
      %s749 = scalar_lea.vmem %s11, %s748
      %p750 = pneg %p341
      %p751 = pneg %p338
      %p752 = scmp.lt.s32.totalorder %s37, 11
      %s753 = scalar_select %p752, %s37, 11
      %s754 = scalar_lea.vmem %s12, %s753
      %p755 = pneg %p367
      %p756 = pneg %p364
      %p757 = scmp.lt.s32.totalorder %s37, 11
      %s758 = scalar_select %p757, %s37, 11
      %s759 = smul.addr %s758, 16
      %s760 = smul.addr %s759, 4
      %s761 = scalar_lea.vmem %s13, %s760
      %p762 = pneg %p393
      %p763 = pneg %p390
      %p764 = scmp.lt.s32.totalorder %s37, 11
      %s765 = scalar_select %p764, %s37, 11
      %s766 = scalar_lea.vmem %s14, %s765
      %p767 = pneg %p419
      %p768 = pneg %p416
      %p769 = pneg %p440
      %p770 = pneg %p437
      %p771 = pneg %p461
      %p772 = pneg %p458
      %p773 = pneg %p482
      %p774 = pneg %p479
      %p775 = pneg %p508
      %p776 = pneg %p505
      %s777 = smul.u32 2, %s36
      %p778 = scmp.lt.s32.totalorder %s777, 3
      %s779 = scalar_select %p778, %s777, 3
      %s780 = smul.addr %s779, 8
      %s781 = scalar_lea.vmem %s18, %s780
      %p782 = pneg %p534
      %p783 = pneg %p531
      %s784 = smul.u32 2, %s36
      %p785 = scmp.lt.s32.totalorder %s784, 3
      %s786 = scalar_select %p785, %s784, 3
      %s787 = smul.addr %s786, 8
      %s788 = scalar_lea.vmem %s19, %s787
      %p789 = pneg %p560
      %p790 = pneg %p557
      %s791 = smul.u32 2, %s36
      %p792 = scmp.lt.s32.totalorder %s791, 3
      %s793 = scalar_select %p792, %s791, 3
      %s794 = smul.addr %s793, 8
      %s795 = scalar_lea.vmem %s20, %s794
      %s796 = smul.u32 2, %s36
      %p797 = scmp.lt.s32.totalorder %s796, 3
      %s798 = scalar_select %p797, %s796, 3
      %s799 = smul.addr %s798, 8
      %s800 = scalar_lea.vmem %s0, %s799
      %s801 = smul.u32 2, %s36
      %p802 = scmp.lt.s32.totalorder %s37, 11
      %s803 = scalar_select %p802, %s37, 11
      %s804 = scalar_lea.vmem %s3, %s803
      %p805 = scmp.lt.s32.totalorder %s37, 11
      %s806 = scalar_select %p805, %s37, 11
      %s807 = scalar_lea.vmem %s4, %s806
      %p808 = scmp.lt.s32.totalorder %s37, 11
      %s809 = scalar_select %p808, %s37, 11
      %s810 = smul.addr %s809, 4
      %s811 = smul.addr %s810, 4
      %s812 = scalar_lea.vmem %s5, %s811
      %p813 = scmp.lt.s32.totalorder %s37, 11
      %s814 = scalar_select %p813, %s37, 11
      %s815 = scalar_lea.vmem %s6, %s814
      %p816 = scmp.lt.s32.totalorder %s37, 11
      %s817 = scalar_select %p816, %s37, 11
      %s818 = smul.addr %s817, 4
      %s819 = smul.addr %s818, 4
      %s820 = scalar_lea.vmem %s7, %s819
      %p821 = scmp.lt.s32.totalorder %s37, 11
      %s822 = scalar_select %p821, %s37, 11
      %s823 = scalar_lea.vmem %s8, %s822
      %p824 = scmp.lt.s32.totalorder %s37, 11
      %s825 = scalar_select %p824, %s37, 11
      %s826 = scalar_lea.vmem %s9, %s825
      %p827 = scmp.lt.s32.totalorder %s37, 11
      %s828 = scalar_select %p827, %s37, 11
      %s829 = scalar_lea.vmem %s10, %s828
      %p830 = scmp.lt.s32.totalorder %s37, 11
      %s831 = scalar_select %p830, %s37, 11
      %s832 = smul.addr %s831, 16
      %s833 = smul.addr %s832, 4
      %s834 = scalar_lea.vmem %s11, %s833
      %p835 = scmp.lt.s32.totalorder %s37, 11
      %s836 = scalar_select %p835, %s37, 11
      %s837 = scalar_lea.vmem %s12, %s836
      %p838 = scmp.lt.s32.totalorder %s37, 11
      %s839 = scalar_select %p838, %s37, 11
      %s840 = smul.addr %s839, 16
      %s841 = smul.addr %s840, 4
      %s842 = scalar_lea.vmem %s13, %s841
      %p843 = scmp.lt.s32.totalorder %s37, 11
      %s844 = scalar_select %p843, %s37, 11
      %s845 = scalar_lea.vmem %s14, %s844
      %s846 = smul.u32 2, %s36
      %p847 = scmp.lt.s32.totalorder %s846, 3
      %s848 = scalar_select %p847, %s846, 3
      %s849 = smul.addr %s848, 8
      %s850 = scalar_lea.vmem %s18, %s849
      %s851 = smul.u32 2, %s36
      %s852 = smul.u32 2, %s36
      %p853 = scmp.lt.s32.totalorder %s852, 3
      %s854 = scalar_select %p853, %s852, 3
      %s855 = smul.addr %s854, 8
      %s856 = scalar_lea.vmem %s19, %s855
      %s857 = smul.u32 2, %s36
      %s858 = smul.u32 2, %s36
      %p859 = scmp.lt.s32.totalorder %s858, 3
      %s860 = scalar_select %p859, %s858, 3
      %s861 = smul.addr %s860, 8
      %s862 = scalar_lea.vmem %s20, %s861
      %s863 = smul.u32 2, %s36
      %p865 = scmp.eq.s32.totalorder %s37, 0
      // Predicated region
      $region93: #{vit_dat_forward.3} parent=91 // pred_check
        %p866 = pneg %p865
      $region94: #{vit_dat_forward.3} parent=91 // pred_check_branch
        %868 = sbr.rel (%p866) target = $region96
      $region95: #{vit_dat_forward.3} parent=91 // pred_region
        %v869 = vld [vmem:[%s800] sm:$0xff]
        %v870 = vld [vmem:[%s800 + $0x8] sm:$0xff]
        %v871 = vld [vmem:[%s1] sm:$0x1]
        %v872 = vld [vmem:[%s2] sm:$0x1]
        %vm873 = vcmask 261120
        %v874 = vsel %vm873, %v869, 0.0
        %875 = vadd.xlane.f32.xlu0 %v874
        %v876 = vpop.xlane.xlu0 %875
        %v877 = vsel %vm873, %v870, 0.0
        %878 = vadd.xlane.f32.xlu0 %v877
        %v879 = vpop.xlane.xlu0 %878
        %v880 = vrcp.pop 32.0
        %v881 = vmul.f32 32.0, %v880
        %v882 = vsub.f32 1.0, %v881
        %v883 = vmul.f32 %v880, %v882
        %v884 = vadd.f32 %v880, %v883
        %vm885 = vweird.f32 %v880
        %v886 = vsel %vm885, %v880, %v884
        %v887 = vmul.f32 %v876, %v886
        %v888 = vmul.f32 %v879, %v886
        %v889 = vsub.f32 %v869, %v887
        %v890 = vsub.f32 %v870, %v888
        %v891 = vmul.f32 %v889, %v889
        %v892 = vmul.f32 %v890, %v890
        %v893 = vsel %vm873, %v891, 0.0
        %894 = vadd.xlane.f32.xlu0 %v893
        %v895 = vpop.xlane.xlu0 %894
        %v896 = vsel %vm873, %v892, 0.0
        %897 = vadd.xlane.f32.xlu0 %v896
        %v898 = vpop.xlane.xlu0 %897
        %v899 = vmul.f32 %v895, %v886
        %v900 = vmul.f32 %v898, %v886
        %v901 = vadd.f32 %v899, 1e-05
        %v902 = vadd.f32 %v900, 1e-05
        %v903 = vrsqrt.pop %v901
        %v904 = vmul.f32 %v903, %v901
        %v905 = vmul.f32 %v904, %v903
        %v906 = vmul.f32 0.5, %v905
        %v907 = vsub.f32 1.5, %v906
        %v908 = vmul.f32 %v903, %v907
        %vm909 = vweird.f32 %v901
        %vm910 = vweird.f32 %v903
        %vm911 = vmor %vm909, %vm910
        %v912 = vsel %vm911, %v903, %v908
        %v913 = vrsqrt.pop %v902
        %v914 = vmul.f32 %v913, %v902
        %v915 = vmul.f32 %v914, %v913
        %v916 = vmul.f32 0.5, %v915
        %v917 = vsub.f32 1.5, %v916
        %v918 = vmul.f32 %v913, %v917
        %vm919 = vweird.f32 %v902
        %vm920 = vweird.f32 %v913
        %vm921 = vmor %vm919, %vm920
        %v922 = vsel %vm921, %v913, %v918
        %v923 = vmul.f32 %v889, %v912
        %v924 = vmul.f32 %v890, %v922
        %v926 = vperm.slane %v871, 0
        %v928 = vmul.f32 %v923, %v926
        %v929 = vmul.f32 %v924, %v926
        %v931 = vperm.slane %v872, 0
        %v933 = vadd.f32 %v928, %v931
        %v934 = vadd.f32 %v929, %v931
        %935 = vst.msk [vmem:[#allocation2] sm:$0xff] %vm873, %v933
        %936 = vst.msk [vmem:[#allocation2 + $0x8] sm:$0xff] %vm873, %v934
      $region96: #{vit_dat_forward.3} parent=91 // pred_fallthru
        _
      %v937 = vld [vmem:[#allocation2] sm:$0xff]
      %v938 = vld [vmem:[#allocation2 + $0x8] sm:$0xff]
      %v939 = vld [vmem:[%s804] sm:$0x1]
      %v940 = vld [vmem:[%s807] sm:$0x1]
      %vm941 = vcmask 261120
      %v942 = vsel %vm941, %v937, 0.0
      %943 = vadd.xlane.f32.xlu0 %v942
      %v944 = vpop.xlane.xlu0 %943
      %v945 = vsel %vm941, %v938, 0.0
      %946 = vadd.xlane.f32.xlu0 %v945
      %v947 = vpop.xlane.xlu0 %946
      %v948 = vrcp.pop 32.0
      %v949 = vmul.f32 32.0, %v948
      %v950 = vsub.f32 1.0, %v949
      %v951 = vmul.f32 %v948, %v950
      %v952 = vadd.f32 %v948, %v951
      %vm953 = vweird.f32 %v948
      %v954 = vsel %vm953, %v948, %v952
      %v955 = vmul.f32 %v944, %v954
      %v956 = vmul.f32 %v947, %v954
      %v957 = vsub.f32 %v937, %v955
      %v958 = vsub.f32 %v938, %v956
      %v959 = vmul.f32 %v957, %v957
      %v960 = vmul.f32 %v958, %v958
      %v961 = vsel %vm941, %v959, 0.0
      %962 = vadd.xlane.f32.xlu0 %v961
      %v963 = vpop.xlane.xlu0 %962
      %v964 = vsel %vm941, %v960, 0.0
      %965 = vadd.xlane.f32.xlu0 %v964
      %v966 = vpop.xlane.xlu0 %965
      %v967 = vmul.f32 %v963, %v954
      %v968 = vmul.f32 %v966, %v954
      %v969 = vadd.f32 %v967, 1e-05
      %v970 = vadd.f32 %v968, 1e-05
      %v971 = vrsqrt.pop %v969
      %v972 = vmul.f32 %v971, %v969
      %v973 = vmul.f32 %v972, %v971
      %v974 = vmul.f32 0.5, %v973
      %v975 = vsub.f32 1.5, %v974
      %v976 = vmul.f32 %v971, %v975
      %vm977 = vweird.f32 %v969
      %vm978 = vweird.f32 %v971
      %vm979 = vmor %vm977, %vm978
      %v980 = vsel %vm979, %v971, %v976
      %v981 = vrsqrt.pop %v970
      %v982 = vmul.f32 %v981, %v970
      %v983 = vmul.f32 %v982, %v981
      %v984 = vmul.f32 0.5, %v983
      %v985 = vsub.f32 1.5, %v984
      %v986 = vmul.f32 %v981, %v985
      %vm987 = vweird.f32 %v970
      %vm988 = vweird.f32 %v981
      %vm989 = vmor %vm987, %vm988
      %v990 = vsel %vm989, %v981, %v986
      %v991 = vmul.f32 %v957, %v980
      %v992 = vmul.f32 %v958, %v990
      %v994 = vperm.slane %v939, 0
      %v996 = vmul.f32 %v991, %v994
      %v997 = vmul.f32 %v992, %v994
      %v999 = vperm.slane %v940, 0
      %v1001 = vadd.f32 %v996, %v999
      %v1002 = vadd.f32 %v997, %v999
      %v1003 = vpack.c.bf16 %v1002, %v1001
      %v1004 = vld [vmem:[%s812] sm:$0xf]
      %v1005 = vld [vmem:[%s812 + $0x4] sm:$0xf]
      %v1006 = vld [vmem:[%s812 + $0x8] sm:$0xf]
      %v1007 = vld [vmem:[%s812 + $0xc] sm:$0xf]
      %v1008 = vld [vmem:[%s815] sm:$0x1]
      %v1010 = vperm.slane %v1008, 0
      %v1016 = vunpack.c.l.b16 %v1004
      %v1017 = vunpack.c.l.b16 %v1005
      %v1018 = vunpack.c.l.b16 %v1006
      %v1019 = vunpack.c.l.b16 %v1007
      %v1020 = vpack.c.b16 %v1017, %v1016
      %v1021 = vpack.c.b16 %v1019, %v1018
      %v1025 = vsel %vm941, %v1003, 0
      %1027 = vmatpush.bf16.msra.mxu0 0
      %1028 = vmatpush.bf16.msra.mxu0 0
      %1029 = vmatpush.bf16.msra.mxu0 0
      %1030 = vmatpush.bf16.msra.mxu0 0
      %1031 = vmatpush.bf16.msra.mxu0 0
      %1032 = vmatpush.bf16.msra.mxu0 0
      %1033 = vmatpush.bf16.msra.mxu0 %v1021
      %1034 = vmatpush.bf16.msra.mxu0 %v1020
      %1035 = vmatmul.bf16.gmra.mxu0 %v1025
      %v1036 = vpop.f32.mrf.mxu0
      %v1037 = vadd.f32 %v1010, %v1036
      %v1038 = vpop.f32.mrf.mxu0
      %v1039 = vadd.f32 %v1010, %v1038
      %1040 = vdwg.mxu0
      %v1041 = vpack.c.bf16 %v1037, %v1037
      %v1042 = vpack.c.bf16 %v1039, %v1039
      %vm1043 = vcmask 781312
      %1044 = vst.msk [vmem:[#allocation3] sm:$0xf] %vm1043, %v1041
      %1045 = vst.msk [vmem:[#allocation3 + $0x4] sm:$0xf] %vm1043, %v1042
      %v1046 = vlaneseq
      %v1047 = vand.u32 %v1046, 127
      %vm1048 = vcmp.lt.s32.totalorder %v1047, 5
      %v1049 = vld [vmem:[#allocation3] sm:$0xf]
      %v1050 = vld [vmem:[#allocation3 + $0x4] sm:$0xf]
      %v1053 = vunpack.c.l.b16 %v1049
      %v1054 = vunpack.c.l.b16 %v1050
      %v1055 = vpack.c.b16 %v1054, %v1053
      %1056 = vrot.lane.b32.xlu0 %v1055, 96
      %v1057 = vpop.permute.xlu0 %1056
      %vm1058 = vcmask 64512
      %v1060 = vsel %vm1058, %v1055, 0
      %v1063 = vsel %vm1058, %v1057, 0
      %1065 = vmatpush.bf16.xpose.msra.mxu0 0
      %1066 = vmatpush.bf16.xpose.msra.mxu0 0
      %1067 = vmatpush.bf16.xpose.msra.mxu0 0
      %1068 = vmatpush.bf16.xpose.msra.mxu0 0
      %1069 = vmatpush.bf16.xpose.msra.mxu0 0
      %1070 = vmatpush.bf16.xpose.msra.mxu0 0
      %1071 = vmatpush.bf16.xpose.msra.mxu0 0
      %1072 = vmatpush.bf16.xpose.msra.mxu0 %v1063
      %1073 = vmatmul.bf16.gmra.mxu0 %v1060
      %v1074 = vpop.f32.mrf.mxu0
      %v1075 = vadd.f32 0.0, %v1074
      %v1076 = vpop.f32.mrf.mxu0
      %v1077 = vadd.f32 0.0, %v1076
      %1078 = vdwg.mxu0
      %v1079 = vsel %vm1048, %v1075, -1e+30
      %v1080 = vsel %vm1048, %v1077, -1e+30
      %vm1081 = vcmask 130048
      %v1082 = vsel %vm1081, %v1079, -inf
      %1083 = vmax.xlane.f32.xlu0 %v1082
      %v1084 = vpop.xlane.xlu0 %1083
      %v1085 = vsel %vm1081, %v1080, -inf
      %1086 = vmax.xlane.f32.xlu0 %v1085
      %v1087 = vpop.xlane.xlu0 %1086
      %v1088 = vsub.f32 %v1079, %v1084
      %v1089 = vsub.f32 %v1080, %v1087
      %v1090 = vmul.f32 %v1088, 1.442695
      %v1091 = vpow.pop %v1090
      %v1092 = vmul.f32 %v1089, 1.442695
      %v1093 = vpow.pop %v1092
      %v1094 = vsel %vm1081, %v1091, 0.0
      %1095 = vadd.xlane.f32.xlu0 %v1094
      %v1096 = vpop.xlane.xlu0 %1095
      %v1097 = vsel %vm1081, %v1093, 0.0
      %1098 = vadd.xlane.f32.xlu0 %v1097
      %v1099 = vpop.xlane.xlu0 %1098
      %v1100 = vrcp.pop %v1096
      %v1101 = vrcp.pop %v1099
      %v1102 = vmul.f32 %v1091, %v1100
      %v1103 = vmul.f32 %v1093, %v1101
      %v1104 = vpack.c.bf16 %v1103, %v1102
      %1105 = vrot.lane.b32.xlu0 %v1055, 64
      %v1106 = vpop.permute.xlu0 %1105
      %v1109 = vsel %vm1081, %v1104, 0
      %1111 = vmatpush.bf16.msra.mxu0 0
      %1112 = vmatpush.bf16.msra.mxu0 0
      %1113 = vmatpush.bf16.msra.mxu0 0
      %1114 = vmatpush.bf16.msra.mxu0 0
      %1115 = vmatpush.bf16.msra.mxu0 0
      %1116 = vmatpush.bf16.msra.mxu0 0
      %1117 = vmatpush.bf16.msra.mxu0 0
      %1118 = vmatpush.bf16.msra.mxu0 %v1106
      %1119 = vmatmul.bf16.gmra.mxu0 %v1109
      %v1120 = vpop.f32.mrf.mxu0
      %v1121 = vadd.f32 0.0, %v1120
      %v1122 = vpop.f32.mrf.mxu0
      %v1123 = vadd.f32 0.0, %v1122
      %1124 = vdwg.mxu0
      %v1125 = vpack.c.bf16 %v1121, %v1121
      %v1126 = vpack.c.bf16 %v1123, %v1123
      %vm1127 = vcmask 60416
      %1128 = vst.msk [vmem:[#allocation4] sm:$0xf] %vm1127, %v1125
      %1129 = vst.msk [vmem:[#allocation4 + $0x4] sm:$0xf] %vm1127, %v1126
      %v1130 = vld [vmem:[#allocation3] sm:$0xf]
      %v1131 = vld [vmem:[#allocation3 + $0x4] sm:$0xf]
      %v1134 = vunpack.c.l.b16 %v1130
      %v1135 = vunpack.c.l.b16 %v1131
      %v1136 = vpack.c.b16 %v1135, %v1134
      %1137 = vrot.lane.b32.xlu0 %v1136, 120
      %v1138 = vpop.permute.xlu0 %1137
      %1139 = vrot.lane.b32.xlu0 %v1136, 88
      %v1140 = vpop.permute.xlu0 %1139
      %v1142 = vsel %vm1058, %v1138, 0
      %v1145 = vsel %vm1058, %v1140, 0
      %1147 = vmatpush.bf16.xpose.msra.mxu0 0
      %1148 = vmatpush.bf16.xpose.msra.mxu0 0
      %1149 = vmatpush.bf16.xpose.msra.mxu0 0
      %1150 = vmatpush.bf16.xpose.msra.mxu0 0
      %1151 = vmatpush.bf16.xpose.msra.mxu0 0
      %1152 = vmatpush.bf16.xpose.msra.mxu0 0
      %1153 = vmatpush.bf16.xpose.msra.mxu0 0
      %1154 = vmatpush.bf16.xpose.msra.mxu0 %v1145
      %1155 = vmatmul.bf16.gmra.mxu0 %v1142
      %v1156 = vpop.f32.mrf.mxu0
      %v1157 = vadd.f32 0.0, %v1156
      %v1158 = vpop.f32.mrf.mxu0
      %v1159 = vadd.f32 0.0, %v1158
      %1160 = vdwg.mxu0
      %v1161 = vsel %vm1048, %v1157, -1e+30
      %v1162 = vsel %vm1048, %v1159, -1e+30
      %v1163 = vsel %vm1081, %v1161, -inf
      %1164 = vmax.xlane.f32.xlu0 %v1163
      %v1165 = vpop.xlane.xlu0 %1164
      %v1166 = vsel %vm1081, %v1162, -inf
      %1167 = vmax.xlane.f32.xlu0 %v1166
      %v1168 = vpop.xlane.xlu0 %1167
      %v1169 = vsub.f32 %v1161, %v1165
      %v1170 = vsub.f32 %v1162, %v1168
      %v1171 = vmul.f32 %v1169, 1.442695
      %v1172 = vpow.pop %v1171
      %v1173 = vmul.f32 %v1170, 1.442695
      %v1174 = vpow.pop %v1173
      %v1175 = vsel %vm1081, %v1172, 0.0
      %1176 = vadd.xlane.f32.xlu0 %v1175
      %v1177 = vpop.xlane.xlu0 %1176
      %v1178 = vsel %vm1081, %v1174, 0.0
      %1179 = vadd.xlane.f32.xlu0 %v1178
      %v1180 = vpop.xlane.xlu0 %1179
      %v1181 = vrcp.pop %v1177
      %v1182 = vrcp.pop %v1180
      %v1183 = vmul.f32 %v1172, %v1181
      %v1184 = vmul.f32 %v1174, %v1182
      %v1185 = vpack.c.bf16 %v1184, %v1183
      %1186 = vrot.lane.b32.xlu0 %v1136, 56
      %v1187 = vpop.permute.xlu0 %1186
      %v1190 = vsel %vm1081, %v1185, 0
      %1192 = vmatpush.bf16.msra.mxu0 0
      %1193 = vmatpush.bf16.msra.mxu0 0
      %1194 = vmatpush.bf16.msra.mxu0 0
      %1195 = vmatpush.bf16.msra.mxu0 0
      %1196 = vmatpush.bf16.msra.mxu0 0
      %1197 = vmatpush.bf16.msra.mxu0 0
      %1198 = vmatpush.bf16.msra.mxu0 0
      %1199 = vmatpush.bf16.msra.mxu0 %v1187
      %1200 = vmatmul.bf16.gmra.mxu0 %v1190
      %v1201 = vpop.f32.mrf.mxu0
      %v1202 = vadd.f32 0.0, %v1201
      %v1203 = vpop.f32.mrf.mxu0
      %v1204 = vadd.f32 0.0, %v1203
      %1205 = vdwg.mxu0
      %v1206 = vpack.c.bf16 %v1202, %v1202
      %v1207 = vpack.c.bf16 %v1204, %v1204
      %1210 = vrot.lane.b32.xlu0 %v1206, 8
      %v1211 = vpop.permute.xlu0 %1210
      %1212 = vrot.lane.b32.xlu0 %v1207, 8
      %v1213 = vpop.permute.xlu0 %1212
      %vm1216 = vcmask 126016
      %1217 = vst.msk [vmem:[#allocation4] sm:$0xf] %vm1216, %v1211
      %1218 = vst.msk [vmem:[#allocation4 + $0x4] sm:$0xf] %vm1216, %v1213
      %v1219 = vld [vmem:[#allocation3] sm:$0xf]
      %v1220 = vld [vmem:[#allocation3 + $0x4] sm:$0xf]
      %v1223 = vunpack.c.l.b16 %v1219
      %v1224 = vunpack.c.l.b16 %v1220
      %v1225 = vpack.c.b16 %v1224, %v1223
      %1226 = vrot.lane.b32.xlu0 %v1225, 112
      %v1227 = vpop.permute.xlu0 %1226
      %1228 = vrot.lane.b32.xlu0 %v1225, 80
      %v1229 = vpop.permute.xlu0 %1228
      %v1231 = vsel %vm1058, %v1227, 0
      %v1234 = vsel %vm1058, %v1229, 0
      %1236 = vmatpush.bf16.xpose.msra.mxu0 0
      %1237 = vmatpush.bf16.xpose.msra.mxu0 0
      %1238 = vmatpush.bf16.xpose.msra.mxu0 0
      %1239 = vmatpush.bf16.xpose.msra.mxu0 0
      %1240 = vmatpush.bf16.xpose.msra.mxu0 0
      %1241 = vmatpush.bf16.xpose.msra.mxu0 0
      %1242 = vmatpush.bf16.xpose.msra.mxu0 0
      %1243 = vmatpush.bf16.xpose.msra.mxu0 %v1234
      %1244 = vmatmul.bf16.gmra.mxu0 %v1231
      %v1245 = vpop.f32.mrf.mxu0
      %v1246 = vadd.f32 0.0, %v1245
      %v1247 = vpop.f32.mrf.mxu0
      %v1248 = vadd.f32 0.0, %v1247
      %1249 = vdwg.mxu0
      %v1250 = vsel %vm1048, %v1246, -1e+30
      %v1251 = vsel %vm1048, %v1248, -1e+30
      %v1252 = vsel %vm1081, %v1250, -inf
      %1253 = vmax.xlane.f32.xlu0 %v1252
      %v1254 = vpop.xlane.xlu0 %1253
      %v1255 = vsel %vm1081, %v1251, -inf
      %1256 = vmax.xlane.f32.xlu0 %v1255
      %v1257 = vpop.xlane.xlu0 %1256
      %v1258 = vsub.f32 %v1250, %v1254
      %v1259 = vsub.f32 %v1251, %v1257
      %v1260 = vmul.f32 %v1258, 1.442695
      %v1261 = vpow.pop %v1260
      %v1262 = vmul.f32 %v1259, 1.442695
      %v1263 = vpow.pop %v1262
      %v1264 = vsel %vm1081, %v1261, 0.0
      %1265 = vadd.xlane.f32.xlu0 %v1264
      %v1266 = vpop.xlane.xlu0 %1265
      %v1267 = vsel %vm1081, %v1263, 0.0
      %1268 = vadd.xlane.f32.xlu0 %v1267
      %v1269 = vpop.xlane.xlu0 %1268
      %v1270 = vrcp.pop %v1266
      %v1271 = vrcp.pop %v1269
      %v1272 = vmul.f32 %v1261, %v1270
      %v1273 = vmul.f32 %v1263, %v1271
      %v1274 = vpack.c.bf16 %v1273, %v1272
      %1275 = vrot.lane.b32.xlu0 %v1225, 48
      %v1276 = vpop.permute.xlu0 %1275
      %v1279 = vsel %vm1081, %v1274, 0
      %1281 = vmatpush.bf16.msra.mxu0 0
      %1282 = vmatpush.bf16.msra.mxu0 0
      %1283 = vmatpush.bf16.msra.mxu0 0
      %1284 = vmatpush.bf16.msra.mxu0 0
      %1285 = vmatpush.bf16.msra.mxu0 0
      %1286 = vmatpush.bf16.msra.mxu0 0
      %1287 = vmatpush.bf16.msra.mxu0 0
      %1288 = vmatpush.bf16.msra.mxu0 %v1276
      %1289 = vmatmul.bf16.gmra.mxu0 %v1279
      %v1290 = vpop.f32.mrf.mxu0
      %v1291 = vadd.f32 0.0, %v1290
      %v1292 = vpop.f32.mrf.mxu0
      %v1293 = vadd.f32 0.0, %v1292
      %1294 = vdwg.mxu0
      %v1295 = vpack.c.bf16 %v1291, %v1291
      %v1296 = vpack.c.bf16 %v1293, %v1293
      %1299 = vrot.lane.b32.xlu0 %v1295, 16
      %v1300 = vpop.permute.xlu0 %1299
      %1301 = vrot.lane.b32.xlu0 %v1296, 16
      %v1302 = vpop.permute.xlu0 %1301
      %vm1305 = vcmask 191616
      %1306 = vst.msk [vmem:[#allocation4] sm:$0xf] %vm1305, %v1300
      %1307 = vst.msk [vmem:[#allocation4 + $0x4] sm:$0xf] %vm1305, %v1302
      %v1308 = vld [vmem:[#allocation3] sm:$0xf]
      %v1309 = vld [vmem:[#allocation3 + $0x4] sm:$0xf]
      %v1312 = vunpack.c.l.b16 %v1308
      %v1313 = vunpack.c.l.b16 %v1309
      %v1314 = vpack.c.b16 %v1313, %v1312
      %1315 = vrot.lane.b32.xlu0 %v1314, 104
      %v1316 = vpop.permute.xlu0 %1315
      %1317 = vrot.lane.b32.xlu0 %v1314, 72
      %v1318 = vpop.permute.xlu0 %1317
      %v1320 = vsel %vm1058, %v1316, 0
      %v1323 = vsel %vm1058, %v1318, 0
      %1325 = vmatpush.bf16.xpose.msra.mxu0 0
      %1326 = vmatpush.bf16.xpose.msra.mxu0 0
      %1327 = vmatpush.bf16.xpose.msra.mxu0 0
      %1328 = vmatpush.bf16.xpose.msra.mxu0 0
      %1329 = vmatpush.bf16.xpose.msra.mxu0 0
      %1330 = vmatpush.bf16.xpose.msra.mxu0 0
      %1331 = vmatpush.bf16.xpose.msra.mxu0 0
      %1332 = vmatpush.bf16.xpose.msra.mxu0 %v1323
      %1333 = vmatmul.bf16.gmra.mxu0 %v1320
      %v1334 = vpop.f32.mrf.mxu0
      %v1335 = vadd.f32 0.0, %v1334
      %v1336 = vpop.f32.mrf.mxu0
      %v1337 = vadd.f32 0.0, %v1336
      %1338 = vdwg.mxu0
      %v1339 = vsel %vm1048, %v1335, -1e+30
      %v1340 = vsel %vm1048, %v1337, -1e+30
      %v1341 = vsel %vm1081, %v1339, -inf
      %1342 = vmax.xlane.f32.xlu0 %v1341
      %v1343 = vpop.xlane.xlu0 %1342
      %v1344 = vsel %vm1081, %v1340, -inf
      %1345 = vmax.xlane.f32.xlu0 %v1344
      %v1346 = vpop.xlane.xlu0 %1345
      %v1347 = vsub.f32 %v1339, %v1343
      %v1348 = vsub.f32 %v1340, %v1346
      %v1349 = vmul.f32 %v1347, 1.442695
      %v1350 = vpow.pop %v1349
      %v1351 = vmul.f32 %v1348, 1.442695
      %v1352 = vpow.pop %v1351
      %v1353 = vsel %vm1081, %v1350, 0.0
      %1354 = vadd.xlane.f32.xlu0 %v1353
      %v1355 = vpop.xlane.xlu0 %1354
      %v1356 = vsel %vm1081, %v1352, 0.0
      %1357 = vadd.xlane.f32.xlu0 %v1356
      %v1358 = vpop.xlane.xlu0 %1357
      %v1359 = vrcp.pop %v1355
      %v1360 = vrcp.pop %v1358
      %v1361 = vmul.f32 %v1350, %v1359
      %v1362 = vmul.f32 %v1352, %v1360
      %v1363 = vpack.c.bf16 %v1362, %v1361
      %1364 = vrot.lane.b32.xlu0 %v1314, 40
      %v1365 = vpop.permute.xlu0 %1364
      %v1368 = vsel %vm1081, %v1363, 0
      %1370 = vmatpush.bf16.msra.mxu0 0
      %1371 = vmatpush.bf16.msra.mxu0 0
      %1372 = vmatpush.bf16.msra.mxu0 0
      %1373 = vmatpush.bf16.msra.mxu0 0
      %1374 = vmatpush.bf16.msra.mxu0 0
      %1375 = vmatpush.bf16.msra.mxu0 0
      %1376 = vmatpush.bf16.msra.mxu0 0
      %1377 = vmatpush.bf16.msra.mxu0 %v1365
      %1378 = vmatmul.bf16.gmra.mxu0 %v1368
      %v1379 = vpop.f32.mrf.mxu0
      %v1380 = vadd.f32 0.0, %v1379
      %v1381 = vpop.f32.mrf.mxu0
      %v1382 = vadd.f32 0.0, %v1381
      %1383 = vdwg.mxu0
      %v1384 = vpack.c.bf16 %v1380, %v1380
      %v1385 = vpack.c.bf16 %v1382, %v1382
      %1388 = vrot.lane.b32.xlu0 %v1384, 24
      %v1389 = vpop.permute.xlu0 %1388
      %1390 = vrot.lane.b32.xlu0 %v1385, 24
      %v1391 = vpop.permute.xlu0 %1390
      %vm1394 = vcmask 257216
      %1395 = vst.msk [vmem:[#allocation4] sm:$0xf] %vm1394, %v1389
      %1396 = vst.msk [vmem:[#allocation4 + $0x4] sm:$0xf] %vm1394, %v1391
      %v1397 = vld [vmem:[#allocation4] sm:$0xf]
      %v1398 = vld [vmem:[#allocation4 + $0x4] sm:$0xf]
      %v1399 = vld [vmem:[%s820] sm:$0xf]
      %v1400 = vld [vmem:[%s820 + $0x4] sm:$0xf]
      %v1401 = vld [vmem:[%s820 + $0x8] sm:$0xf]
      %v1402 = vld [vmem:[%s820 + $0xc] sm:$0xf]
      %v1403 = vld [vmem:[%s823] sm:$0x1]
      %v1405 = vperm.slane %v1403, 0
      %v1409 = vunpack.c.l.b16 %v1397
      %v1410 = vunpack.c.l.b16 %v1398
      %v1411 = vpack.c.b16 %v1410, %v1409
      %v1416 = vunpack.c.l.b16 %v1399
      %v1417 = vunpack.c.l.b16 %v1400
      %v1418 = vunpack.c.l.b16 %v1401
      %v1419 = vunpack.c.l.b16 %v1402
      %v1420 = vpack.c.b16 %v1417, %v1416
      %v1421 = vpack.c.b16 %v1419, %v1418
      %v1425 = vsel %vm941, %v1411, 0
      %1427 = vmatpush.bf16.msra.mxu0 0
      %1428 = vmatpush.bf16.msra.mxu0 0
      %1429 = vmatpush.bf16.msra.mxu0 0
      %1430 = vmatpush.bf16.msra.mxu0 0
      %1431 = vmatpush.bf16.msra.mxu0 0
      %1432 = vmatpush.bf16.msra.mxu0 0
      %1433 = vmatpush.bf16.msra.mxu0 %v1421
      %1434 = vmatpush.bf16.msra.mxu0 %v1420
      %1435 = vmatmul.bf16.gmra.mxu0 %v1425
      %v1436 = vpop.f32.mrf.mxu0
      %v1437 = vadd.f32 %v1405, %v1436
      %v1438 = vpop.f32.mrf.mxu0
      %v1439 = vadd.f32 %v1405, %v1438
      %1440 = vdwg.mxu0
      %v1441 = vadd.f32 %v937, %v1437
      %v1442 = vadd.f32 %v938, %v1439
      %v1443 = vld [vmem:[%s826] sm:$0x1]
      %v1444 = vld [vmem:[%s829] sm:$0x1]
      %v1445 = vsel %vm941, %v1441, 0.0
      %1446 = vadd.xlane.f32.xlu0 %v1445
      %v1447 = vpop.xlane.xlu0 %1446
      %v1448 = vsel %vm941, %v1442, 0.0
      %1449 = vadd.xlane.f32.xlu0 %v1448
      %v1450 = vpop.xlane.xlu0 %1449
      %v1451 = vmul.f32 %v1447, %v954
      %v1452 = vmul.f32 %v1450, %v954
      %v1453 = vsub.f32 %v1441, %v1451
      %v1454 = vsub.f32 %v1442, %v1452
      %v1455 = vmul.f32 %v1453, %v1453
      %v1456 = vmul.f32 %v1454, %v1454
      %v1457 = vsel %vm941, %v1455, 0.0
      %1458 = vadd.xlane.f32.xlu0 %v1457
      %v1459 = vpop.xlane.xlu0 %1458
      %v1460 = vsel %vm941, %v1456, 0.0
      %1461 = vadd.xlane.f32.xlu0 %v1460
      %v1462 = vpop.xlane.xlu0 %1461
      %v1463 = vmul.f32 %v1459, %v954
      %v1464 = vmul.f32 %v1462, %v954
      %v1465 = vadd.f32 %v1463, 1e-05
      %v1466 = vadd.f32 %v1464, 1e-05
      %v1467 = vrsqrt.pop %v1465
      %v1468 = vmul.f32 %v1467, %v1465
      %v1469 = vmul.f32 %v1468, %v1467
      %v1470 = vmul.f32 0.5, %v1469
      %v1471 = vsub.f32 1.5, %v1470
      %v1472 = vmul.f32 %v1467, %v1471
      %vm1473 = vweird.f32 %v1465
      %vm1474 = vweird.f32 %v1467
      %vm1475 = vmor %vm1473, %vm1474
      %v1476 = vsel %vm1475, %v1467, %v1472
      %v1477 = vrsqrt.pop %v1466
      %v1478 = vmul.f32 %v1477, %v1466
      %v1479 = vmul.f32 %v1478, %v1477
      %v1480 = vmul.f32 0.5, %v1479
      %v1481 = vsub.f32 1.5, %v1480
      %v1482 = vmul.f32 %v1477, %v1481
      %vm1483 = vweird.f32 %v1466
      %vm1484 = vweird.f32 %v1477
      %vm1485 = vmor %vm1483, %vm1484
      %v1486 = vsel %vm1485, %v1477, %v1482
      %v1487 = vmul.f32 %v1453, %v1476
      %v1488 = vmul.f32 %v1454, %v1486
      %v1490 = vperm.slane %v1443, 0
      %v1492 = vmul.f32 %v1487, %v1490
      %v1493 = vmul.f32 %v1488, %v1490
      %v1495 = vperm.slane %v1444, 0
      %v1497 = vadd.f32 %v1492, %v1495
      %v1498 = vadd.f32 %v1493, %v1495
      %v1499 = vpack.c.bf16 %v1498, %v1497
      %v1500 = vld [vmem:[%s834] sm:$0xf]
      %v1501 = vld [vmem:[%s834 + $0x4] sm:$0xf]
      %v1502 = vld [vmem:[%s834 + $0x8] sm:$0xf]
      %v1503 = vld [vmem:[%s834 + $0xc] sm:$0xf]
      %v1504 = vld [vmem:[%s834 + $0x10] sm:$0xf]
      %v1505 = vld [vmem:[%s834 + $0x14] sm:$0xf]
      %v1506 = vld [vmem:[%s834 + $0x18] sm:$0xf]
      %v1507 = vld [vmem:[%s834 + $0x1c] sm:$0xf]
      %v1508 = vld [vmem:[%s834 + $0x20] sm:$0xf]
      %v1509 = vld [vmem:[%s834 + $0x24] sm:$0xf]
      %v1510 = vld [vmem:[%s834 + $0x28] sm:$0xf]
      %v1511 = vld [vmem:[%s834 + $0x2c] sm:$0xf]
      %v1512 = vld [vmem:[%s834 + $0x30] sm:$0xf]
      %v1513 = vld [vmem:[%s834 + $0x34] sm:$0xf]
      %v1514 = vld [vmem:[%s834 + $0x38] sm:$0xf]
      %v1515 = vld [vmem:[%s834 + $0x3c] sm:$0xf]
      %v1516 = vld [vmem:[%s837] sm:$0x1]
      %v1518 = vperm.slane %v1516, 0
      %v1536 = vunpack.c.l.b16 %v1500
      %v1537 = vunpack.c.l.b16 %v1501
      %v1538 = vunpack.c.l.b16 %v1502
      %v1539 = vunpack.c.l.b16 %v1503
      %v1540 = vunpack.c.l.b16 %v1504
      %v1541 = vunpack.c.l.b16 %v1505
      %v1542 = vunpack.c.l.b16 %v1506
      %v1543 = vunpack.c.l.b16 %v1507
      %v1544 = vunpack.c.l.b16 %v1508
      %v1545 = vunpack.c.l.b16 %v1509
      %v1546 = vunpack.c.l.b16 %v1510
      %v1547 = vunpack.c.l.b16 %v1511
      %v1548 = vunpack.c.l.b16 %v1512
      %v1549 = vunpack.c.l.b16 %v1513
      %v1550 = vunpack.c.l.b16 %v1514
      %v1551 = vunpack.c.l.b16 %v1515
      %v1552 = vpack.c.b16 %v1537, %v1536
      %v1553 = vpack.c.b16 %v1539, %v1538
      %v1554 = vpack.c.b16 %v1541, %v1540
      %v1555 = vpack.c.b16 %v1543, %v1542
      %v1556 = vpack.c.b16 %v1545, %v1544
      %v1557 = vpack.c.b16 %v1547, %v1546
      %v1558 = vpack.c.b16 %v1549, %v1548
      %v1559 = vpack.c.b16 %v1551, %v1550
      %v1561 = vsel %vm941, %v1499, 0
      %v1564 = vsel %vm941, %v1552, 0
      %v1567 = vsel %vm941, %v1553, 0
      %v1570 = vsel %vm941, %v1554, 0
      %v1573 = vsel %vm941, %v1555, 0
      %v1576 = vsel %vm941, %v1556, 0
      %v1579 = vsel %vm941, %v1557, 0
      %v1582 = vsel %vm941, %v1558, 0
      %v1585 = vsel %vm941, %v1559, 0
      %1587 = vmatpush.bf16.xpose.msra.mxu0 %v1585
      %1588 = vmatpush.bf16.xpose.msra.mxu0 %v1582
      %1589 = vmatpush.bf16.xpose.msra.mxu0 %v1579
      %1590 = vmatpush.bf16.xpose.msra.mxu0 %v1576
      %1591 = vmatpush.bf16.xpose.msra.mxu0 %v1573
      %1592 = vmatpush.bf16.xpose.msra.mxu0 %v1570
      %1593 = vmatpush.bf16.xpose.msra.mxu0 %v1567
      %1594 = vmatpush.bf16.xpose.msra.mxu0 %v1564
      %1595 = vmatmul.bf16.gmra.mxu0 %v1561
      %v1596 = vpop.f32.mrf.mxu0
      %v1597 = vadd.f32 %v1518, %v1596
      %v1598 = vpop.f32.mrf.mxu0
      %v1599 = vadd.f32 %v1518, %v1598
      %1600 = vdwg.mxu0
      %v1601 = vmul.f32 %v1597, 1.702
      %v1602 = vmul.f32 %v1599, 1.702
      %v1603 = vxor.u32 %v1601, 2147483648
      %v1604 = vxor.u32 %v1602, 2147483648
      %v1605 = vmul.f32 %v1603, 1.442695
      %v1606 = vpow.pop %v1605
      %v1607 = vmul.f32 %v1604, 1.442695
      %v1608 = vpow.pop %v1607
      %v1609 = vadd.f32 %v1606, 1.0
      %v1610 = vadd.f32 %v1608, 1.0
      %v1611 = vrcp.pop %v1609
      %v1612 = vmul.f32 %v1609, %v1611
      %v1613 = vsub.f32 1.0, %v1612
      %v1614 = vmul.f32 %v1611, %v1613
      %v1615 = vadd.f32 %v1611, %v1614
      %vm1616 = vweird.f32 %v1609
      %vm1617 = vweird.f32 %v1611
      %vm1618 = vmor %vm1616, %vm1617
      %v1619 = vsel %vm1618, %v1611, %v1615
      %v1620 = vand.u32 2147483647, %v1609
      %vm1621 = vcmp.eq.f32.partialorder %v1620, 8.507059e+37
      %v1622 = vand.u32 %v1609, 2147483648
      %v1623 = vor.u32 1.1754944e-38, %v1622
      %v1624 = vsel %vm1621, %v1623, %v1619
      %v1625 = vmul.f32 1.0, %v1624
      %v1626 = vrcp.pop %v1610
      %v1627 = vmul.f32 %v1610, %v1626
      %v1628 = vsub.f32 1.0, %v1627
      %v1629 = vmul.f32 %v1626, %v1628
      %v1630 = vadd.f32 %v1626, %v1629
      %vm1631 = vweird.f32 %v1610
      %vm1632 = vweird.f32 %v1626
      %vm1633 = vmor %vm1631, %vm1632
      %v1634 = vsel %vm1633, %v1626, %v1630
      %v1635 = vand.u32 2147483647, %v1610
      %vm1636 = vcmp.eq.f32.partialorder %v1635, 8.507059e+37
      %v1637 = vand.u32 %v1610, 2147483648
      %v1638 = vor.u32 1.1754944e-38, %v1637
      %v1639 = vsel %vm1636, %v1638, %v1634
      %v1640 = vmul.f32 1.0, %v1639
      %v1641 = vmul.f32 %v1597, %v1625
      %v1642 = vmul.f32 %v1599, %v1640
      %v1643 = vpack.c.bf16 %v1642, %v1641
      %v1644 = vld [vmem:[%s842] sm:$0xf]
      %v1645 = vld [vmem:[%s842 + $0x4] sm:$0xf]
      %v1646 = vld [vmem:[%s842 + $0x8] sm:$0xf]
      %v1647 = vld [vmem:[%s842 + $0xc] sm:$0xf]
      %v1648 = vld [vmem:[%s842 + $0x10] sm:$0xf]
      %v1649 = vld [vmem:[%s842 + $0x14] sm:$0xf]
      %v1650 = vld [vmem:[%s842 + $0x18] sm:$0xf]
      %v1651 = vld [vmem:[%s842 + $0x1c] sm:$0xf]
      %v1652 = vld [vmem:[%s842 + $0x20] sm:$0xf]
      %v1653 = vld [vmem:[%s842 + $0x24] sm:$0xf]
      %v1654 = vld [vmem:[%s842 + $0x28] sm:$0xf]
      %v1655 = vld [vmem:[%s842 + $0x2c] sm:$0xf]
      %v1656 = vld [vmem:[%s842 + $0x30] sm:$0xf]
      %v1657 = vld [vmem:[%s842 + $0x34] sm:$0xf]
      %v1658 = vld [vmem:[%s842 + $0x38] sm:$0xf]
      %v1659 = vld [vmem:[%s842 + $0x3c] sm:$0xf]
      %v1676 = vunpack.c.l.b16 %v1644
      %v1677 = vunpack.c.l.b16 %v1645
      %v1678 = vunpack.c.l.b16 %v1646
      %v1679 = vunpack.c.l.b16 %v1647
      %v1680 = vunpack.c.l.b16 %v1648
      %v1681 = vunpack.c.l.b16 %v1649
      %v1682 = vunpack.c.l.b16 %v1650
      %v1683 = vunpack.c.l.b16 %v1651
      %v1684 = vunpack.c.l.b16 %v1652
      %v1685 = vunpack.c.l.b16 %v1653
      %v1686 = vunpack.c.l.b16 %v1654
      %v1687 = vunpack.c.l.b16 %v1655
      %v1688 = vunpack.c.l.b16 %v1656
      %v1689 = vunpack.c.l.b16 %v1657
      %v1690 = vunpack.c.l.b16 %v1658
      %v1691 = vunpack.c.l.b16 %v1659
      %v1692 = vpack.c.b16 %v1677, %v1676
      %v1693 = vpack.c.b16 %v1679, %v1678
      %v1694 = vpack.c.b16 %v1681, %v1680
      %v1695 = vpack.c.b16 %v1683, %v1682
      %v1696 = vpack.c.b16 %v1685, %v1684
      %v1697 = vpack.c.b16 %v1687, %v1686
      %v1698 = vpack.c.b16 %v1689, %v1688
      %v1699 = vpack.c.b16 %v1691, %v1690
      %1708 = vmatpush.bf16.msra.mxu0 %v1699
      %1709 = vmatpush.bf16.msra.mxu0 %v1698
      %1710 = vmatpush.bf16.msra.mxu0 %v1697
      %1711 = vmatpush.bf16.msra.mxu0 %v1696
      %1712 = vmatpush.bf16.msra.mxu0 %v1695
      %1713 = vmatpush.bf16.msra.mxu0 %v1694
      %1714 = vmatpush.bf16.msra.mxu0 %v1693
      %1715 = vmatpush.bf16.msra.mxu0 %v1692
      %1716 = vmatmul.bf16.gmra.mxu0 %v1643
      %v1717 = vpop.f32.mrf.mxu0
      %v1718 = vadd.f32 0.0, %v1717
      %v1719 = vpop.f32.mrf.mxu0
      %v1720 = vadd.f32 0.0, %v1719
      %1721 = vdwg.mxu0
      %v1722 = vadd.f32 %v1441, %v1718
      %v1723 = vadd.f32 %v1442, %v1720
      %v1724 = vld [vmem:[%s845] sm:$0x1]
      %v1726 = vperm.slane %v1724, 0
      %v1728 = vadd.f32 %v1722, %v1726
      %v1729 = vadd.f32 %v1723, %v1726
      %1730 = vst.msk [vmem:[#allocation2] sm:$0xff] %vm941, %v1728
      %1731 = vst.msk [vmem:[#allocation2 + $0x8] sm:$0xff] %vm941, %v1729
      %p1732 = scmp.eq.s32.totalorder %s37, 10
      // Predicated region
      $region97: #{vit_dat_forward.3} parent=91 // pred_check
        %p1733 = pneg %p1732
      $region98: #{vit_dat_forward.3} parent=91 // pred_check_branch
        %1735 = sbr.rel (%p1733) target = $region100
      $region99: #{vit_dat_forward.3} parent=91 // pred_region
        %1736 = vst.msk [vmem:[%s850] sm:$0xff] %vm941, %v1728
        %1737 = vst.msk [vmem:[%s850 + $0x8] sm:$0xff] %vm941, %v1729
      $region100: #{vit_dat_forward.3} parent=91 // pred_fallthru
        _
      %p1738 = scmp.eq.s32.totalorder %s37, 11
      // Predicated region
      $region101: #{vit_dat_forward.3} parent=91 // pred_check
        %p1739 = pneg %p1738
      $region102: #{vit_dat_forward.3} parent=91 // pred_check_branch
        %1741 = sbr.rel (%p1739) target = $region104
      $region103: #{vit_dat_forward.3} parent=91 // pred_region
        %v1742 = vld [vmem:[%s15] sm:$0x1]
        %v1743 = vld [vmem:[%s16] sm:$0x1]
        %v1744 = vsel %vm941, %v1728, 0.0
        %1745 = vadd.xlane.f32.xlu0 %v1744
        %v1746 = vpop.xlane.xlu0 %1745
        %v1747 = vsel %vm941, %v1729, 0.0
        %1748 = vadd.xlane.f32.xlu0 %v1747
        %v1749 = vpop.xlane.xlu0 %1748
        %v1750 = vmul.f32 %v1746, %v954
        %v1751 = vmul.f32 %v1749, %v954
        %v1752 = vsub.f32 %v1728, %v1750
        %v1753 = vsub.f32 %v1729, %v1751
        %v1754 = vmul.f32 %v1752, %v1752
        %v1755 = vmul.f32 %v1753, %v1753
        %v1756 = vsel %vm941, %v1754, 0.0
        %1757 = vadd.xlane.f32.xlu0 %v1756
        %v1758 = vpop.xlane.xlu0 %1757
        %v1759 = vsel %vm941, %v1755, 0.0
        %1760 = vadd.xlane.f32.xlu0 %v1759
        %v1761 = vpop.xlane.xlu0 %1760
        %v1762 = vmul.f32 %v1758, %v954
        %v1763 = vmul.f32 %v1761, %v954
        %v1764 = vadd.f32 %v1762, 1e-05
        %v1765 = vadd.f32 %v1763, 1e-05
        %v1766 = vrsqrt.pop %v1764
        %v1767 = vmul.f32 %v1766, %v1764
        %v1768 = vmul.f32 %v1767, %v1766
        %v1769 = vmul.f32 0.5, %v1768
        %v1770 = vsub.f32 1.5, %v1769
        %v1771 = vmul.f32 %v1766, %v1770
        %vm1772 = vweird.f32 %v1764
        %vm1773 = vweird.f32 %v1766
        %vm1774 = vmor %vm1772, %vm1773
        %v1775 = vsel %vm1774, %v1766, %v1771
        %v1776 = vrsqrt.pop %v1765
        %v1777 = vmul.f32 %v1776, %v1765
        %v1778 = vmul.f32 %v1777, %v1776
        %v1779 = vmul.f32 0.5, %v1778
        %v1780 = vsub.f32 1.5, %v1779
        %v1781 = vmul.f32 %v1776, %v1780
        %vm1782 = vweird.f32 %v1765
        %vm1783 = vweird.f32 %v1776
        %vm1784 = vmor %vm1782, %vm1783
        %v1785 = vsel %vm1784, %v1776, %v1781
        %v1786 = vmul.f32 %v1752, %v1775
        %v1787 = vmul.f32 %v1753, %v1785
        %v1789 = vperm.slane %v1742, 0
        %v1791 = vmul.f32 %v1786, %v1789
        %v1792 = vmul.f32 %v1787, %v1789
        %v1794 = vperm.slane %v1743, 0
        %v1796 = vadd.f32 %v1791, %v1794
        %v1797 = vadd.f32 %v1792, %v1794
        %1798 = vst.msk [vmem:[%s856] sm:$0xff] %vm941, %v1796
        %1799 = vst.msk [vmem:[%s856 + $0x8] sm:$0xff] %vm941, %v1797
        %v1800 = vpack.c.bf16 %v1797, %v1796
        %v1801 = vld [vmem:[%s17] sm:$0xf]
        %v1802 = vld [vmem:[%s17 + $0x4] sm:$0xf]
        %v1803 = vld [vmem:[%s17 + $0x8] sm:$0xf]
        %v1804 = vld [vmem:[%s17 + $0xc] sm:$0xf]
        %v1809 = vunpack.c.l.b16 %v1801
        %v1810 = vunpack.c.l.b16 %v1802
        %v1811 = vunpack.c.l.b16 %v1803
        %v1812 = vunpack.c.l.b16 %v1804
        %v1813 = vpack.c.b16 %v1810, %v1809
        %v1814 = vpack.c.b16 %v1812, %v1811
        %v1818 = vsel %vm941, %v1800, 0
        %1820 = vmatpush.bf16.msra.mxu0 0
        %1821 = vmatpush.bf16.msra.mxu0 0
        %1822 = vmatpush.bf16.msra.mxu0 0
        %1823 = vmatpush.bf16.msra.mxu0 0
        %1824 = vmatpush.bf16.msra.mxu0 0
        %1825 = vmatpush.bf16.msra.mxu0 0
        %1826 = vmatpush.bf16.msra.mxu0 %v1814
        %1827 = vmatpush.bf16.msra.mxu0 %v1813
        %1828 = vmatmul.bf16.gmra.mxu0 %v1818
        %v1829 = vpop.f32.mrf.mxu0
        %v1830 = vadd.f32 0.0, %v1829
        %v1831 = vpop.f32.mrf.mxu0
        %v1832 = vadd.f32 0.0, %v1831
        %1833 = vdwg.mxu0
        %1834 = vst.msk [vmem:[%s862] sm:$0xff] %vm1081, %v1830
        %1835 = vst.msk [vmem:[%s862 + $0x8] sm:$0xff] %vm1081, %v1832
      $region104: #{vit_dat_forward.3} parent=91 // pred_fallthru
        _
      %s1836 = smul.u32 2, %s36
      %p1837 = scmp.lt.s32.totalorder %s1836, 3
      %s1838 = scalar_select %p1837, %s1836, 3
      %s1839 = smul.addr %s1838, 8
      %s1840 = scalar_lea.vmem %s18, %s1839
      %s1841 = smul.u32 2, %s36
      %p1842 = scmp.lt.s32.totalorder %s1841, 3
      %s1843 = scalar_select %p1842, %s1841, 3
      %s1844 = smul.addr %s1843, 8
      %s1845 = scalar_lea.vmem %s19, %s1844
      %s1846 = smul.u32 2, %s36
      %p1847 = scmp.lt.s32.totalorder %s1846, 3
      %s1848 = scalar_select %p1847, %s1846, 3
      %s1849 = smul.addr %s1848, 8
      %s1850 = scalar_lea.vmem %s20, %s1849
      // Predicated region
      $region105: #{vit_dat_forward.3} parent=91 // pred_check
        %p1851 = pneg %p505
      $region106: #{vit_dat_forward.3} parent=91 // pred_check_branch
        %1853 = sbr.rel (%p1851) target = $region108
      $region107: #{vit_dat_forward.3} parent=91 // pred_region
        %s1854 = smul.u32 2, %s36
      $region108: #{vit_dat_forward.3} parent=91 // pred_fallthru
        _
      // Predicated region
      $region109: #{vit_dat_forward.3} parent=91 // pred_check
        %p1855 = pneg %p531
      $region110: #{vit_dat_forward.3} parent=91 // pred_check_branch
        %1857 = sbr.rel (%p1855) target = $region112
      $region111: #{vit_dat_forward.3} parent=91 // pred_region
        %s1858 = smul.u32 2, %s36
      $region112: #{vit_dat_forward.3} parent=91 // pred_fallthru
        _
      // Predicated region
      $region113: #{vit_dat_forward.3} parent=91 // pred_check
        %p1859 = pneg %p557
      $region114: #{vit_dat_forward.3} parent=91 // pred_check_branch
        %1861 = sbr.rel (%p1859) target = $region116
      $region115: #{vit_dat_forward.3} parent=91 // pred_region
        %s1862 = smul.u32 2, %s36
      $region116: #{vit_dat_forward.3} parent=91 // pred_fallthru
        _
    $region92: #{vit_dat_forward.3} parent=5 // pred_fallthru
      _
    %p1863 = scmp.le.s32.totalorder 2, %s27
    // Predicated region
    $region117: #{vit_dat_forward.3} parent=5 // pred_check
      %p1864 = pneg %p1863
    $region118: #{vit_dat_forward.3} parent=5 // pred_check_branch
      %1866 = sbr.rel (%p1864) target = $region120
    $region119: #{vit_dat_forward.3} parent=5 // pred_region
      %s1867 = ssub.s32 %s27, 2
      // Predicated region
      $region121: #{vit_dat_forward.3} parent=119 // pred_check
        %p1868 = pneg %p511
      $region122: #{vit_dat_forward.3} parent=119 // pred_check_branch
        %1870 = sbr.rel (%p1868) target = $region124
      $region123: #{vit_dat_forward.3} parent=119 // pred_region
        %s1871 = smul.u32 2, %s38
        %p1872 = scmp.lt.s32.totalorder %s1871, 3
        %s1873 = scalar_select %p1872, %s1871, 3
        %s1874 = smul.addr %s1873, 8
        %s1875 = scalar_lea.vmem %s18, %s1874
      $region124: #{vit_dat_forward.3} parent=119 // pred_fallthru
        _
      // Predicated region
      $region125: #{vit_dat_forward.3} parent=119 // pred_check
        %p1876 = pneg %p537
      $region126: #{vit_dat_forward.3} parent=119 // pred_check_branch
        %1878 = sbr.rel (%p1876) target = $region128
      $region127: #{vit_dat_forward.3} parent=119 // pred_region
        %s1879 = smul.u32 2, %s38
        %p1880 = scmp.lt.s32.totalorder %s1879, 3
        %s1881 = scalar_select %p1880, %s1879, 3
        %s1882 = smul.addr %s1881, 8
        %s1883 = scalar_lea.vmem %s19, %s1882
      $region128: #{vit_dat_forward.3} parent=119 // pred_fallthru
        _
      // Predicated region
      $region129: #{vit_dat_forward.3} parent=119 // pred_check
        %p1884 = pneg %p563
      $region130: #{vit_dat_forward.3} parent=119 // pred_check_branch
        %1886 = sbr.rel (%p1884) target = $region132
      $region131: #{vit_dat_forward.3} parent=119 // pred_region
        %s1887 = smul.u32 2, %s38
        %p1888 = scmp.lt.s32.totalorder %s1887, 3
        %s1889 = scalar_select %p1888, %s1887, 3
        %s1890 = smul.addr %s1889, 8
        %s1891 = scalar_lea.vmem %s20, %s1890
      $region132: #{vit_dat_forward.3} parent=119 // pred_fallthru
        _
    $region120: #{vit_dat_forward.3} parent=5 // pred_fallthru
      _
  $region6: #{vit_dat_forward.3} parent=0 // loop_footer
    %s31 = sadd.s32 1, %s27
  $region7: #{vit_dat_forward.3} parent=0 // loop_footer_branch
    %26 = sbr.rel target = $region3
  $region8: #{vit_dat_forward.3} parent=0 // loop_exit
    _

</llo_original>
